<compile_context>
chip_gen: v7x
topology: tpu7x:2x2x1
jax: 0.10.0
libtpu: 0.0.40
codegen_flags: <defaults>
</compile_context>

<pallas_src>
import functools

import jax
import jax.numpy as jnp
from jax.experimental import pallas as pl
from jax.experimental.pallas import tpu as pltpu


def _round_up(n, m=128):
    return ((n + m - 1) // m) * m


def bottleneck_kernel(x_ref, w1_ref, s1_ref, b1_ref,
                      w2_ref, s2_ref, b2_ref,
                      w3_ref, s3_ref, b3_ref,
                      out_ref, pad_scr):
    """One (batch, row-tile) step.  x_ref: (1,1,TH+2,W,Cp), out_ref: (1,TH,W,Cp)."""
    THp2, W, Cp = x_ref.shape[2], x_ref.shape[3], x_ref.shape[4]
    TH = THp2 - 2
    Pp = w1_ref.shape[1]
    t = pl.program_id(1)
    H_total = TH * pl.num_programs(1)

    # ---- conv1 (1x1) + bn1 + relu over the halo tile (bf16 MXU, f32 acc) ----
    x_mat = x_ref[0, 0].reshape(THp2 * W, Cp).astype(jnp.bfloat16)
    y1 = jnp.dot(x_mat, w1_ref[...], preferred_element_type=jnp.float32)
    y1 = jnp.maximum(y1 * s1_ref[...] + b1_ref[...], 0.0)

    # Zero the rows that are the conv2 zero-padding of the image (global padded
    # rows 0 and H+1).  Halo rows of interior tiles keep their real values.
    row = jax.lax.broadcasted_iota(jnp.int32, (THp2, 1, 1), 0) + t * TH
    valid = (row >= 1) & (row <= H_total)
    y1_3d = jnp.where(valid, y1.reshape(THp2, W, Pp), 0.0)

    # ---- stage into W-padded scratch; zero only the 2 border columns ----
    pad_scr[:, 0:1, :] = jnp.zeros((THp2, 1, Pp), jnp.float32)
    pad_scr[:, W + 1:W + 2, :] = jnp.zeros((THp2, 1, Pp), jnp.float32)
    pad_scr[:, 1:W + 1, :] = y1_3d

    # ---- conv2 (3x3, stride 1, pad 1) as ONE im2col matmul + bn2 + relu ----
    patches = [pad_scr[kh:kh + TH, kw:kw + W, :].reshape(TH * W, Pp)
               for kh in range(3) for kw in range(3)]
    a2 = jnp.concatenate(patches, axis=1).astype(jnp.bfloat16)   # (TH*W, 9*Pp)
    y2 = jnp.dot(a2, w2_ref[...], preferred_element_type=jnp.float32)
    y2 = jnp.maximum(y2 * s2_ref[...] + b2_ref[...], 0.0)

    # ---- conv3 (1x1) + bn3 + identity residual + relu ----
    y3 = jnp.dot(y2.astype(jnp.bfloat16), w3_ref[...],
                 preferred_element_type=jnp.float32)
    y3 = y3 * s3_ref[...] + b3_ref[...]
    res = x_ref[0, 0, 1:TH + 1].reshape(TH * W, Cp)   # f32, read late (short live range)
    out = jnp.maximum(y3 + res, 0.0)
    out_ref[0] = out.reshape(TH, W, Cp).astype(out_ref.dtype)


def fold_bn(gamma, beta, mean, var, eps=1e-5):
    """Fold inference-mode BatchNorm into per-channel scale & shift (1-D)."""
    s = gamma / jnp.sqrt(var + eps)
    b = beta - mean * s
    return s.astype(jnp.float32), b.astype(jnp.float32)


def prepare_params(raw):
    """Pad channels to 128-multiples, reshape w2 to (9*Pp, Pp), cast weights bf16."""
    Cin, P = raw["w1"].shape
    Cout = raw["w3"].shape[1]
    assert Cout == Cin, "identity residual requires inplanes == planes*4"
    Cp, Pp = _round_up(Cin), _round_up(P)

    w1 = jnp.zeros((Cp, Pp), jnp.bfloat16).at[:Cin, :P].set(
        raw["w1"].astype(jnp.bfloat16))
    w2 = jnp.zeros((3, 3, Pp, Pp), jnp.bfloat16).at[:, :, :P, :P].set(
        raw["w2"].astype(jnp.bfloat16)).reshape(9 * Pp, Pp)
    w3 = jnp.zeros((Pp, Cp), jnp.bfloat16).at[:P, :Cout].set(
        raw["w3"].astype(jnp.bfloat16))

    def padv(v, n):
        return jnp.zeros((1, n), jnp.float32).at[0, :v.shape[0]].set(v)

    return dict(w1=w1, s1=padv(raw["s1"], Pp), b1=padv(raw["b1"], Pp),
                w2=w2, s2=padv(raw["s2"], Pp), b2=padv(raw["b2"], Pp),
                w3=w3, s3=padv(raw["s3"], Cp), b3=padv(raw["b3"], Cp))


def _pick_tile_h(H, W, Cp, budget_bytes=4 * 1024 * 1024):
    """Largest divisor of H whose f32 halo tile stays under ~4 MiB."""
    for th in range(H, 0, -1):
        if H % th == 0 and (th + 2) * W * Cp * 4 <= budget_bytes:
            return th
    return 1


@functools.partial(jax.jit, static_argnames=("tile_h",))
def bottleneck_forward(x_nchw, prep, tile_h=None):
    """x_nchw: (N, Cin, H, W) float32.  Returns (N, Cin, H, W)."""
    N, Cin, H, W = x_nchw.shape
    Cp, Pp = prep["w1"].shape
    TH = tile_h if tile_h is not None else _pick_tile_h(H, W, Cp)
    assert H % TH == 0, "tile_h must divide H"
    nT = H // TH

    # NCHW -> NHWC, pad channels to Cp, add 1-row halo top/bottom, build tiles.
    x = jnp.transpose(x_nchw, (0, 2, 3, 1))
    x = jnp.pad(x, ((0, 0), (1, 1), (0, 0), (0, Cp - Cin)))
    x_tiles = jnp.stack([x[:, t * TH:t * TH + TH + 2] for t in range(nT)],
                        axis=1)                          # (N, nT, TH+2, W, Cp)

    # cost / VMEM budgeting
    flops = 2 * N * H * W * (Cp * Pp + 9 * Pp * Pp + Pp * Cp)
    w_bytes = (Cp * Pp + 9 * Pp * Pp + Pp * Cp) * 2 + 6 * max(Pp, Cp) * 4
    bytes_accessed = x_tiles.size * 4 + N * H * W * Cp * 4 + w_bytes
    cost = pl.CostEstimate(flops=flops, transcendentals=0,
                           bytes_accessed=bytes_accessed)
    need = (2 * ((TH + 2) * W * Cp * 4 + TH * W * Cp * 4)     # double-buffered I/O
            + (TH + 2) * (W + 2) * Pp * 4                     # pad scratch
            + TH * W * 9 * Pp * 6                             # im2col temporaries
            + w_bytes)
    vmem_limit = int(min(64 * 1024 * 1024, max(16 * 1024 * 1024, 4 * need)))

    out_nhwc = pl.pallas_call(
        bottleneck_kernel,
        out_shape=jax.ShapeDtypeStruct((N, H, W, Cp), x_nchw.dtype),
        grid_spec=pltpu.PrefetchScalarGridSpec(
            num_scalar_prefetch=0,
            grid=(N, nT),
            in_specs=[
                pl.BlockSpec((1, 1, TH + 2, W, Cp), lambda n, t: (n, t, 0, 0, 0)),
                pl.BlockSpec((Cp, Pp), lambda n, t: (0, 0)),
                pl.BlockSpec((1, Pp), lambda n, t: (0, 0)),
                pl.BlockSpec((1, Pp), lambda n, t: (0, 0)),
                pl.BlockSpec((9 * Pp, Pp), lambda n, t: (0, 0)),
                pl.BlockSpec((1, Pp), lambda n, t: (0, 0)),
                pl.BlockSpec((1, Pp), lambda n, t: (0, 0)),
                pl.BlockSpec((Pp, Cp), lambda n, t: (0, 0)),
                pl.BlockSpec((1, Cp), lambda n, t: (0, 0)),
                pl.BlockSpec((1, Cp), lambda n, t: (0, 0)),
            ],
            out_specs=pl.BlockSpec((1, TH, W, Cp), lambda n, t: (n, t, 0, 0)),
            scratch_shapes=[pltpu.VMEM((TH + 2, W + 2, Pp), jnp.float32)],
        ),
        compiler_params=pltpu.CompilerParams(
            dimension_semantics=("parallel", "parallel"),
            vmem_limit_bytes=vmem_limit),
        cost_estimate=cost,
    )(x_tiles, prep["w1"], prep["s1"], prep["b1"],
      prep["w2"], prep["s2"], prep["b2"],
      prep["w3"], prep["s3"], prep["b3"])

    out_nhwc = out_nhwc[:, :, :, :Cin]
    return jnp.transpose(out_nhwc, (0, 3, 1, 2))   # NHWC -> NCHW (module boundary)


def reference_forward(x_nchw, raw):
    """Pure-JAX reference (NHWC convs, bf16-rounded weights, f32 activations)."""
    x = jnp.transpose(x_nchw, (0, 2, 3, 1))
    dn = ("NHWC", "HWIO", "NHWC")
    rt = lambda w: w.astype(jnp.bfloat16).astype(jnp.float32)

    y = jax.lax.conv_general_dilated(
        x, rt(raw["w1"]).reshape(1, 1, *raw["w1"].shape),
        (1, 1), "VALID", dimension_numbers=dn)
    y = jnp.maximum(y * raw["s1"] + raw["b1"], 0.0)

    y = jax.lax.conv_general_dilated(
        y, rt(raw["w2"]), (1, 1), "SAME", dimension_numbers=dn)
    y = jnp.maximum(y * raw["s2"] + raw["b2"], 0.0)

    y = jax.lax.conv_general_dilated(
        y, rt(raw["w3"]).reshape(1, 1, *raw["w3"].shape),
        (1, 1), "VALID", dimension_numbers=dn)
    y = y * raw["s3"] + raw["b3"]
    y = jnp.maximum(y + x, 0.0)
    return jnp.transpose(y, (0, 3, 1, 2))


def make_params(key, inplanes, planes):
    """Raw (unpadded, f32) parameters: 1x1 convs as (Cin,Cout), 3x3 as HWIO."""
    expansion = 4
    cout = planes * expansion
    ks = jax.random.split(key, 16)

    def bn(kg, kb, km, kv, c):
        gamma = jax.random.uniform(kg, (c,), jnp.float32, 0.5, 1.5)
        beta = jax.random.normal(kb, (c,), jnp.float32) * 0.1
        mean = jax.random.normal(km, (c,), jnp.float32) * 0.1
        var = jax.random.uniform(kv, (c,), jnp.float32, 0.5, 1.5)
        return fold_bn(gamma, beta, mean, var)

    w1 = jax.random.normal(ks[0], (inplanes, planes), jnp.float32) * 0.1
    w2 = jax.random.normal(ks[1], (3, 3, planes, planes), jnp.float32) * 0.1
    w3 = jax.random.normal(ks[2], (planes, cout), jnp.float32) * 0.1
    s1, b1 = bn(ks[3], ks[4], ks[5], ks[6], planes)
    s2, b2 = bn(ks[7], ks[8], ks[9], ks[10], planes)
    s3, b3 = bn(ks[11], ks[12], ks[13], ks[14], cout)
    return dict(w1=w1, s1=s1, b1=b1, w2=w2, s2=s2, b2=b2, w3=w3, s3=s3, b3=b3)


if __name__ == "__main__":
    key = jax.random.PRNGKey(0)
    k_x, k_p = jax.random.split(key)

    # Small shapes: inplanes=16, planes=4 (expansion 4 -> identity residual),
    # batch=2, spatial=16x16.  PyTorch-style NCHW input; tile_h=8 -> grid (2, 2).
    N, INPLANES, PLANES, H, W = 2, 16, 4, 16, 16
    x = jax.random.normal(k_x, (N, INPLANES, H, W), jnp.float32)
    raw = make_params(k_p, INPLANES, PLANES)
    prep = prepare_params(raw)

    out = bottleneck_forward(x, prep, tile_h=8)
    jax.block_until_ready(out)

    ref = reference_forward(x, raw)
    assert out.shape == (N, INPLANES, H, W)
    max_err = float(jnp.max(jnp.abs(out - ref)))
    assert jnp.allclose(out, ref, rtol=2e-2, atol=2e-2), f"mismatch vs reference: {max_err}"

    print("KERNEL_OK")
</pallas_src>

<mosaic_0001>
module attributes {stable_mosaic.version = 11 : i64} {
  func.func @bottleneck_kernel(%arg0: i32, %arg1: i32, %arg2: memref<1x1x10x16x128xf32, #tpu.memory_space<vmem>>, %arg3: memref<128x128xbf16, #tpu.memory_space<vmem>>, %arg4: memref<1x128xf32, #tpu.memory_space<vmem>>, %arg5: memref<1x128xf32, #tpu.memory_space<vmem>>, %arg6: memref<1152x128xbf16, #tpu.memory_space<vmem>>, %arg7: memref<1x128xf32, #tpu.memory_space<vmem>>, %arg8: memref<1x128xf32, #tpu.memory_space<vmem>>, %arg9: memref<128x128xbf16, #tpu.memory_space<vmem>>, %arg10: memref<1x128xf32, #tpu.memory_space<vmem>>, %arg11: memref<1x128xf32, #tpu.memory_space<vmem>>, %arg12: memref<1x8x16x128xf32, #tpu.memory_space<vmem>>, %arg13: memref<10x18x128xf32, #tpu.memory_space<vmem>>) attributes {dimension_semantics = [#tpu.dimension_semantics<parallel>, #tpu.dimension_semantics<parallel>], iteration_bounds = array<i64: 2, 2>, scalar_prefetch = 0 : i64, scratch_operands = 1 : i64, tpu.core_type = #tpu.core_type<tc>, window_params = [{transform_indices = @transform_0, window_bounds = array<i64: 1, 1, 10, 16, 128>}, {pipeline_mode = #tpu.pipeline_mode<synchronous>, transform_indices = @transform_1, window_bounds = array<i64: 128, 128>}, {pipeline_mode = #tpu.pipeline_mode<synchronous>, transform_indices = @transform_2, window_bounds = array<i64: 1, 128>}, {pipeline_mode = #tpu.pipeline_mode<synchronous>, transform_indices = @transform_3, window_bounds = array<i64: 1, 128>}, {pipeline_mode = #tpu.pipeline_mode<synchronous>, transform_indices = @transform_4, window_bounds = array<i64: 1152, 128>}, {pipeline_mode = #tpu.pipeline_mode<synchronous>, transform_indices = @transform_5, window_bounds = array<i64: 1, 128>}, {pipeline_mode = #tpu.pipeline_mode<synchronous>, transform_indices = @transform_6, window_bounds = array<i64: 1, 128>}, {pipeline_mode = #tpu.pipeline_mode<synchronous>, transform_indices = @transform_7, window_bounds = array<i64: 128, 128>}, {pipeline_mode = #tpu.pipeline_mode<synchronous>, transform_indices = @transform_8, window_bounds = array<i64: 1, 128>}, {pipeline_mode = #tpu.pipeline_mode<synchronous>, transform_indices = @transform_9, window_bounds = array<i64: 1, 128>}, {transform_indices = @transform_10, window_bounds = array<i64: 1, 8, 16, 128>}]} {
    %c0 = arith.constant 0 : index
    %c0_0 = arith.constant 0 : index
    %c0_1 = arith.constant 0 : index
    %c0_2 = arith.constant 0 : index
    %c0_3 = arith.constant 0 : index
    %0 = vector.load %arg2[%c0, %c0_0, %c0_1, %c0_2, %c0_3] : memref<1x1x10x16x128xf32, #tpu.memory_space<vmem>>, vector<1x1x10x16x128xf32>
    %1 = vector.shape_cast %0 : vector<1x1x10x16x128xf32> to vector<10x16x128xf32>
    %2 = vector.shape_cast %1 : vector<10x16x128xf32> to vector<160x128xf32>
    %3 = arith.truncf %2 : vector<160x128xf32> to vector<160x128xbf16>
    %c0_4 = arith.constant 0 : index
    %c0_5 = arith.constant 0 : index
    %4 = vector.load %arg3[%c0_4, %c0_5] : memref<128x128xbf16, #tpu.memory_space<vmem>>, vector<128x128xbf16>
    %cst = arith.constant dense<0.000000e+00> : vector<160x128xf32>
    %5 = tpu.matmul %3, %4, %cst {dimension_numbers = #tpu.dot_dimension_numbers<[1], [0], [0], [1], [0, 0, 1, 1], [], []>} : vector<160x128xbf16>, vector<128x128xbf16>, vector<160x128xf32> -> vector<160x128xf32>
    %c0_6 = arith.constant 0 : index
    %c0_7 = arith.constant 0 : index
    %6 = vector.load %arg4[%c0_6, %c0_7] : memref<1x128xf32, #tpu.memory_space<vmem>>, vector<1x128xf32>
    %7 = vector.broadcast %6 : vector<1x128xf32> to vector<160x128xf32>
    %8 = arith.mulf %5, %7 : vector<160x128xf32>
    %c0_8 = arith.constant 0 : index
    %c0_9 = arith.constant 0 : index
    %9 = vector.load %arg5[%c0_8, %c0_9] : memref<1x128xf32, #tpu.memory_space<vmem>>, vector<1x128xf32>
    %10 = vector.broadcast %9 : vector<1x128xf32> to vector<160x128xf32>
    %11 = arith.addf %8, %10 : vector<160x128xf32>
    %cst_10 = arith.constant 0.000000e+00 : f32
    %12 = vector.broadcast %cst_10 : f32 to vector<160x128xf32>
    %13 = arith.maximumf %11, %12 : vector<160x128xf32>
    %14 = tpu.iota {dimensions = array<i32: 0>} : vector<10x1x1xi32>
    %c8_i32 = arith.constant 8 : i32
    %15 = arith.muli %arg1, %c8_i32 : i32
    %16 = vector.broadcast %15 : i32 to vector<10x1x1xi32>
    %17 = arith.addi %14, %16 : vector<10x1x1xi32>
    %c1_i32 = arith.constant 1 : i32
    %18 = vector.broadcast %c1_i32 : i32 to vector<10x1x1xi32>
    %19 = arith.cmpi sge, %17, %18 : vector<10x1x1xi32>
    %c16_i32 = arith.constant 16 : i32
    %20 = vector.broadcast %c16_i32 : i32 to vector<10x1x1xi32>
    %21 = arith.cmpi sle, %17, %20 : vector<10x1x1xi32>
    %22 = arith.andi %19, %21 : vector<10x1x1xi1>
    %23 = vector.shape_cast %13 : vector<160x128xf32> to vector<10x16x128xf32>
    %cst_11 = arith.constant 0.000000e+00 : f32
    %24 = vector.shape_cast %22 : vector<10x1x1xi1> to vector<10x1x1xi1>
    %25 = vector.broadcast %24 : vector<10x1x1xi1> to vector<10x16x128xi1>
    %26 = vector.broadcast %cst_11 : f32 to vector<10x16x128xf32>
    %27 = arith.select %25, %23, %26 : vector<10x16x128xi1>, vector<10x16x128xf32>
    %cst_12 = arith.constant 0.000000e+00 : f32
    %28 = vector.broadcast %cst_12 : f32 to vector<10x1x128xf32>
    %c0_13 = arith.constant 0 : index
    %c0_14 = arith.constant 0 : index
    %c0_15 = arith.constant 0 : index
    %29 = vector.load %arg13[%c0_13, %c0_14, %c0_15] : memref<10x18x128xf32, #tpu.memory_space<vmem>>, vector<10x1x128xf32>
    tpu.vector_store %arg13[%c0_13, %c0_14, %c0_15], %28 {strides = array<i32>} : memref<10x18x128xf32, #tpu.memory_space<vmem>>, vector<10x1x128xf32>,
    %cst_16 = arith.constant 0.000000e+00 : f32
    %30 = vector.broadcast %cst_16 : f32 to vector<10x1x128xf32>
    %c0_17 = arith.constant 0 : index
    %c17 = arith.constant 17 : index
    %c0_18 = arith.constant 0 : index
    %31 = vector.load %arg13[%c0_17, %c17, %c0_18] : memref<10x18x128xf32, #tpu.memory_space<vmem>>, vector<10x1x128xf32>
    tpu.vector_store %arg13[%c0_17, %c17, %c0_18], %30 {strides = array<i32>} : memref<10x18x128xf32, #tpu.memory_space<vmem>>, vector<10x1x128xf32>,
    %c0_19 = arith.constant 0 : index
    %c1 = arith.constant 1 : index
    %c0_20 = arith.constant 0 : index
    %32 = vector.load %arg13[%c0_19, %c1, %c0_20] : memref<10x18x128xf32, #tpu.memory_space<vmem>>, vector<10x16x128xf32>
    tpu.vector_store %arg13[%c0_19, %c1, %c0_20], %27 {strides = array<i32>} : memref<10x18x128xf32, #tpu.memory_space<vmem>>, vector<10x16x128xf32>,
    %c0_21 = arith.constant 0 : index
    %c0_22 = arith.constant 0 : index
    %c0_23 = arith.constant 0 : index
    %33 = vector.load %arg13[%c0_21, %c0_22, %c0_23] : memref<10x18x128xf32, #tpu.memory_space<vmem>>, vector<8x16x128xf32>
    %34 = vector.shape_cast %33 : vector<8x16x128xf32> to vector<128x128xf32>
    %c0_24 = arith.constant 0 : index
    %c1_25 = arith.constant 1 : index
    %c0_26 = arith.constant 0 : index
    %35 = vector.load %arg13[%c0_24, %c1_25, %c0_26] : memref<10x18x128xf32, #tpu.memory_space<vmem>>, vector<8x16x128xf32>
    %36 = vector.shape_cast %35 : vector<8x16x128xf32> to vector<128x128xf32>
    %c0_27 = arith.constant 0 : index
    %c2 = arith.constant 2 : index
    %c0_28 = arith.constant 0 : index
    %37 = vector.load %arg13[%c0_27, %c2, %c0_28] : memref<10x18x128xf32, #tpu.memory_space<vmem>>, vector<8x16x128xf32>
    %38 = vector.shape_cast %37 : vector<8x16x128xf32> to vector<128x128xf32>
    %c1_29 = arith.constant 1 : index
    %c0_30 = arith.constant 0 : index
    %c0_31 = arith.constant 0 : index
    %39 = vector.load %arg13[%c1_29, %c0_30, %c0_31] : memref<10x18x128xf32, #tpu.memory_space<vmem>>, vector<8x16x128xf32>
    %40 = vector.shape_cast %39 : vector<8x16x128xf32> to vector<128x128xf32>
    %c1_32 = arith.constant 1 : index
    %c1_33 = arith.constant 1 : index
    %c0_34 = arith.constant 0 : index
    %41 = vector.load %arg13[%c1_32, %c1_33, %c0_34] : memref<10x18x128xf32, #tpu.memory_space<vmem>>, vector<8x16x128xf32>
    %42 = vector.shape_cast %41 : vector<8x16x128xf32> to vector<128x128xf32>
    %c1_35 = arith.constant 1 : index
    %c2_36 = arith.constant 2 : index
    %c0_37 = arith.constant 0 : index
    %43 = vector.load %arg13[%c1_35, %c2_36, %c0_37] : memref<10x18x128xf32, #tpu.memory_space<vmem>>, vector<8x16x128xf32>
    %44 = vector.shape_cast %43 : vector<8x16x128xf32> to vector<128x128xf32>
    %c2_38 = arith.constant 2 : index
    %c0_39 = arith.constant 0 : index
    %c0_40 = arith.constant 0 : index
    %45 = vector.load %arg13[%c2_38, %c0_39, %c0_40] : memref<10x18x128xf32, #tpu.memory_space<vmem>>, vector<8x16x128xf32>
    %46 = vector.shape_cast %45 : vector<8x16x128xf32> to vector<128x128xf32>
    %c2_41 = arith.constant 2 : index
    %c1_42 = arith.constant 1 : index
    %c0_43 = arith.constant 0 : index
    %47 = vector.load %arg13[%c2_41, %c1_42, %c0_43] : memref<10x18x128xf32, #tpu.memory_space<vmem>>, vector<8x16x128xf32>
    %48 = vector.shape_cast %47 : vector<8x16x128xf32> to vector<128x128xf32>
    %c2_44 = arith.constant 2 : index
    %c2_45 = arith.constant 2 : index
    %c0_46 = arith.constant 0 : index
    %49 = vector.load %arg13[%c2_44, %c2_45, %c0_46] : memref<10x18x128xf32, #tpu.memory_space<vmem>>, vector<8x16x128xf32>
    %50 = vector.shape_cast %49 : vector<8x16x128xf32> to vector<128x128xf32>
    %51 = tpu.concatenate %34, %36, %38, %40, %42, %44, %46, %48, %50 in 1 : vector<128x128xf32>, vector<128x128xf32>, vector<128x128xf32>, vector<128x128xf32>, vector<128x128xf32>, vector<128x128xf32>, vector<128x128xf32>, vector<128x128xf32>, vector<128x128xf32> -> vector<128x1152xf32>
    %52 = arith.truncf %51 : vector<128x1152xf32> to vector<128x1152xbf16>
    %c0_47 = arith.constant 0 : index
    %c0_48 = arith.constant 0 : index
    %53 = vector.load %arg6[%c0_47, %c0_48] : memref<1152x128xbf16, #tpu.memory_space<vmem>>, vector<1152x128xbf16>
    %cst_49 = arith.constant dense<0.000000e+00> : vector<128x128xf32>
    %54 = tpu.matmul %52, %53, %cst_49 {dimension_numbers = #tpu.dot_dimension_numbers<[1], [0], [0], [1], [0, 0, 1, 1], [], []>} : vector<128x1152xbf16>, vector<1152x128xbf16>, vector<128x128xf32> -> vector<128x128xf32>
    %c0_50 = arith.constant 0 : index
    %c0_51 = arith.constant 0 : index
    %55 = vector.load %arg7[%c0_50, %c0_51] : memref<1x128xf32, #tpu.memory_space<vmem>>, vector<1x128xf32>
    %56 = vector.broadcast %55 : vector<1x128xf32> to vector<128x128xf32>
    %57 = arith.mulf %54, %56 : vector<128x128xf32>
    %c0_52 = arith.constant 0 : index
    %c0_53 = arith.constant 0 : index
    %58 = vector.load %arg8[%c0_52, %c0_53] : memref<1x128xf32, #tpu.memory_space<vmem>>, vector<1x128xf32>
    %59 = vector.broadcast %58 : vector<1x128xf32> to vector<128x128xf32>
    %60 = arith.addf %57, %59 : vector<128x128xf32>
    %cst_54 = arith.constant 0.000000e+00 : f32
    %61 = vector.broadcast %cst_54 : f32 to vector<128x128xf32>
    %62 = arith.maximumf %60, %61 : vector<128x128xf32>
    %63 = arith.truncf %62 : vector<128x128xf32> to vector<128x128xbf16>
    %c0_55 = arith.constant 0 : index
    %c0_56 = arith.constant 0 : index
    %64 = vector.load %arg9[%c0_55, %c0_56] : memref<128x128xbf16, #tpu.memory_space<vmem>>, vector<128x128xbf16>
    %cst_57 = arith.constant dense<0.000000e+00> : vector<128x128xf32>
    %65 = tpu.matmul %63, %64, %cst_57 {dimension_numbers = #tpu.dot_dimension_numbers<[1], [0], [0], [1], [0, 0, 1, 1], [], []>} : vector<128x128xbf16>, vector<128x128xbf16>, vector<128x128xf32> -> vector<128x128xf32>
    %c0_58 = arith.constant 0 : index
    %c0_59 = arith.constant 0 : index
    %66 = vector.load %arg10[%c0_58, %c0_59] : memref<1x128xf32, #tpu.memory_space<vmem>>, vector<1x128xf32>
    %67 = vector.broadcast %66 : vector<1x128xf32> to vector<128x128xf32>
    %68 = arith.mulf %65, %67 : vector<128x128xf32>
    %c0_60 = arith.constant 0 : index
    %c0_61 = arith.constant 0 : index
    %69 = vector.load %arg11[%c0_60, %c0_61] : memref<1x128xf32, #tpu.memory_space<vmem>>, vector<1x128xf32>
    %70 = vector.broadcast %69 : vector<1x128xf32> to vector<128x128xf32>
    %71 = arith.addf %68, %70 : vector<128x128xf32>
    %c0_62 = arith.constant 0 : index
    %c0_63 = arith.constant 0 : index
    %c1_64 = arith.constant 1 : index
    %c0_65 = arith.constant 0 : index
    %c0_66 = arith.constant 0 : index
    %72 = vector.load %arg2[%c0_62, %c0_63, %c1_64, %c0_65, %c0_66] : memref<1x1x10x16x128xf32, #tpu.memory_space<vmem>>, vector<1x1x8x16x128xf32>
    %73 = vector.shape_cast %72 : vector<1x1x8x16x128xf32> to vector<8x16x128xf32>
    %74 = vector.shape_cast %73 : vector<8x16x128xf32> to vector<128x128xf32>
    %75 = arith.addf %71, %74 : vector<128x128xf32>
    %cst_67 = arith.constant 0.000000e+00 : f32
    %76 = vector.broadcast %cst_67 : f32 to vector<128x128xf32>
    %77 = arith.maximumf %75, %76 : vector<128x128xf32>
    %78 = vector.shape_cast %77 : vector<128x128xf32> to vector<8x16x128xf32>
    %c0_68 = arith.constant 0 : index
    %c0_69 = arith.constant 0 : index
    %c0_70 = arith.constant 0 : index
    %c0_71 = arith.constant 0 : index
    %79 = vector.load %arg12[%c0_68, %c0_69, %c0_70, %c0_71] : memref<1x8x16x128xf32, #tpu.memory_space<vmem>>, vector<1x8x16x128xf32>
    %80 = vector.shape_cast %79 : vector<1x8x16x128xf32> to vector<8x16x128xf32>
    %81 = vector.shape_cast %78 : vector<8x16x128xf32> to vector<1x8x16x128xf32>
    tpu.vector_store %arg12[%c0_68, %c0_69, %c0_70, %c0_71], %81 {strides = array<i32>} : memref<1x8x16x128xf32, #tpu.memory_space<vmem>>, vector<1x8x16x128xf32>,
    return
  }
  func.func @transform_0(%arg0: i32, %arg1: i32) -> (i32, i32, i32, i32, i32) {
    %c0_i32 = arith.constant 0 : i32
    %c0_i32_0 = arith.constant 0 : i32
    %c0_i32_1 = arith.constant 0 : i32
    %c0_i32_2 = arith.constant 0 : i32
    return %arg0, %arg1, %c0_i32, %c0_i32_0, %c0_i32_1 : i32, i32, i32, i32, i32
  }
  func.func @transform_1(%arg0: i32, %arg1: i32) -> (i32, i32) {
    %c0_i32 = arith.constant 0 : i32
    %c0_i32_0 = arith.constant 0 : i32
    %c0_i32_1 = arith.constant 0 : i32
    return %c0_i32, %c0_i32_0 : i32, i32
  }
  func.func @transform_2(%arg0: i32, %arg1: i32) -> (i32, i32) {
    %c0_i32 = arith.constant 0 : i32
    %c0_i32_0 = arith.constant 0 : i32
    %c0_i32_1 = arith.constant 0 : i32
    return %c0_i32, %c0_i32_0 : i32, i32
  }
  func.func @transform_3(%arg0: i32, %arg1: i32) -> (i32, i32) {
    %c0_i32 = arith.constant 0 : i32
    %c0_i32_0 = arith.constant 0 : i32
    %c0_i32_1 = arith.constant 0 : i32
    return %c0_i32, %c0_i32_0 : i32, i32
  }
  func.func @transform_4(%arg0: i32, %arg1: i32) -> (i32, i32) {
    %c0_i32 = arith.constant 0 : i32
    %c0_i32_0 = arith.constant 0 : i32
    %c0_i32_1 = arith.constant 0 : i32
    return %c0_i32, %c0_i32_0 : i32, i32
  }
  func.func @transform_5(%arg0: i32, %arg1: i32) -> (i32, i32) {
    %c0_i32 = arith.constant 0 : i32
    %c0_i32_0 = arith.constant 0 : i32
    %c0_i32_1 = arith.constant 0 : i32
    return %c0_i32, %c0_i32_0 : i32, i32
  }
  func.func @transform_6(%arg0: i32, %arg1: i32) -> (i32, i32) {
    %c0_i32 = arith.constant 0 : i32
    %c0_i32_0 = arith.constant 0 : i32
    %c0_i32_1 = arith.constant 0 : i32
    return %c0_i32, %c0_i32_0 : i32, i32
  }
  func.func @transform_7(%arg0: i32, %arg1: i32) -> (i32, i32) {
    %c0_i32 = arith.constant 0 : i32
    %c0_i32_0 = arith.constant 0 : i32
    %c0_i32_1 = arith.constant 0 : i32
    return %c0_i32, %c0_i32_0 : i32, i32
  }
  func.func @transform_8(%arg0: i32, %arg1: i32) -> (i32, i32) {
    %c0_i32 = arith.constant 0 : i32
    %c0_i32_0 = arith.constant 0 : i32
    %c0_i32_1 = arith.constant 0 : i32
    return %c0_i32, %c0_i32_0 : i32, i32
  }
  func.func @transform_9(%arg0: i32, %arg1: i32) -> (i32, i32) {
    %c0_i32 = arith.constant 0 : i32
    %c0_i32_0 = arith.constant 0 : i32
    %c0_i32_1 = arith.constant 0 : i32
    return %c0_i32, %c0_i32_0 : i32, i32
  }
  func.func @transform_10(%arg0: i32, %arg1: i32) -> (i32, i32, i32, i32) {
    %c0_i32 = arith.constant 0 : i32
    %c0_i32_0 = arith.constant 0 : i32
    %c0_i32_1 = arith.constant 0 : i32
    return %arg0, %arg1, %c0_i32, %c0_i32_0 : i32, i32, i32, i32
  }
}

</mosaic_0001>

<llo_original>
// kernel: bottleneck_forward.1
$region0: #{bottleneck_forward.1}
  #allocation0 [shape = 'u32[]', space=smem, size = 0x4, offset = 0x4, fixed_abs, tag = 'smem constant byte address 0x4 - core index']
  #allocation1 [shape = 'u32[144,128]{1,0:T(1,128)}', space=vmem, size = 0x12000, scoped, tag = 'internal scratch']
  #allocation2 [shape = 'f32[10,18,128]{2,1,0:T(8,128)}', space=vmem, size = 0x1e000, scoped, tag = 'scratch operand']
  %s0 = inlined_call_operand.vmem [shape: f32[2,2,10,16,128], index: 0, kind: input, shape index: {}]
  %s1 = inlined_call_operand.vmem [shape: bf16[128,128], index: 1, kind: input, shape index: {}]
  %s2 = inlined_call_operand.vmem [shape: f32[1,128], index: 2, kind: input, shape index: {}]
  %s3 = inlined_call_operand.vmem [shape: f32[1,128], index: 3, kind: input, shape index: {}]
  %s4 = inlined_call_operand.vmem [shape: bf16[1152,128], index: 4, kind: input, shape index: {}]
  %s5 = inlined_call_operand.vmem [shape: f32[1,128], index: 5, kind: input, shape index: {}]
  %s6 = inlined_call_operand.vmem [shape: f32[1,128], index: 6, kind: input, shape index: {}]
  %s7 = inlined_call_operand.vmem [shape: bf16[128,128], index: 7, kind: input, shape index: {}]
  %s8 = inlined_call_operand.vmem [shape: f32[1,128], index: 8, kind: input, shape index: {}]
  %s9 = inlined_call_operand.vmem [shape: f32[1,128], index: 9, kind: input, shape index: {}]
  %s10 = inlined_call_operand.vmem [shape: f32[2,16,16,128], index: 10, kind: output, shape index: {}]
  %s11 = sld [smem:[#allocation0]]
  $region73: #{bottleneck_forward.1} parent=0
    _
  %s13 = ssub.s32 1, %s11
  %s14 = scalar_select 0, %s13, %s11
  loop: start=0, step=1, limit=6
  $region2: #{bottleneck_forward.1} parent=0 // loop_pre_header
    _
  $region3: #{bottleneck_forward.1} parent=0 // loop_header
    %s16 = sphi 0, %s20
    %p17 = scmp.ge.s32.totalorder %s16, 6
    %s23 = sphi 0, %s35
    %s24 = sphi 0, %s31
    %s25 = sphi 0, %s23
    %s26 = sphi 0, %s24
    %s27 = sphi 0, %s25
    %s28 = sphi 0, %s26
    %s40 = sphi 0, %s42
    %s43 = sphi 0, %s40
    %s44 = sphi 0, %s43
    %s60 = sphi 0, %s44
    %s64 = sphi 0, %s64
    %s66 = sphi 0, %s64
    %s67 = sphi 0, %s66
    %s81 = sphi 0, %s67
    %s85 = sphi 0, %s85
    %s87 = sphi 0, %s85
    %s88 = sphi 0, %s87
    %s102 = sphi 0, %s88
    %s106 = sphi 0, %s106
    %s108 = sphi 0, %s106
    %s109 = sphi 0, %s108
    %s123 = sphi 0, %s109
    %s127 = sphi 0, %s127
    %s129 = sphi 0, %s127
    %s130 = sphi 0, %s129
    %s144 = sphi 0, %s130
    %s148 = sphi 0, %s148
    %s150 = sphi 0, %s148
    %s151 = sphi 0, %s150
    %s165 = sphi 0, %s151
    %s169 = sphi 0, %s169
    %s171 = sphi 0, %s169
    %s172 = sphi 0, %s171
    %s186 = sphi 0, %s172
    %s190 = sphi 0, %s190
    %s192 = sphi 0, %s190
    %s193 = sphi 0, %s192
    %s207 = sphi 0, %s193
    %s211 = sphi 0, %s211
    %s213 = sphi 0, %s211
    %s214 = sphi 0, %s213
    %s228 = sphi 0, %s214
    %s232 = sphi 0, %s232
    %s234 = sphi 0, %s232
    %s235 = sphi 0, %s234
    %s249 = sphi 0, %s235
    %s257 = sphi 0, %s259
    %s260 = sphi 0, %s257
    %s261 = sphi 0, %s260
    %s277 = sphi 0, %s261
  $region4: #{bottleneck_forward.1} parent=0 // loop_header_branch
    %19 = sbr.rel (%p17) target = $region8
  $region5: #{bottleneck_forward.1} parent=0 // loop_body
    %s21 = ssub.s32 %s16, 1
    %s22 = ssub.s32 %s16, 2
    %s29 = sadd.s32 1, %s24
    %p30 = scmp.ge.s32.totalorder %s29, 2
    %s31 = scalar_select %p30, 0, %s29
    %s32 = sadd.s32 1, %s23
    %s33 = scalar_select %p30, %s32, %s23
    %p34 = scmp.ge.s32.totalorder %s33, 2
    %s35 = scalar_select %p34, 0, %s33
    %s36 = ssub.s32 %s23, %s35
    %s37 = ssub.s32 %s24, %s31
    %s38 = sor.u32 %s36, %s37
    %p39 = scmp.eq.s32.totalorder %s38, 0
    %s41 = sadd.s32 %s40, 1
    %s42 = scalar_select %p39, %s40, %s41
    %p45 = pneg %p39
    %p46 = scmp.eq.s32.totalorder %s16, 3
    %p47 = por %p45, %p46
    %p48 = scmp.ne.s32.totalorder %s40, %s43
    %p49 = scmp.eq.s32.totalorder %s16, 0
    %p50 = por %p48, %p49
    %p51 = scmp.ne.s32.totalorder %s40, %s43
    %p52 = scmp.eq.s32.totalorder %s21, 3
    %p53 = por %p51, %p52
    %p54 = scmp.ne.s32.totalorder %s43, %s44
    %p55 = scmp.eq.s32.totalorder %s21, 0
    %p56 = por %p54, %p55
    %p57 = scmp.ne.s32.totalorder %s43, %s44
    %p58 = scmp.eq.s32.totalorder %s22, 3
    %p59 = por %p57, %p58
    %p61 = scmp.ne.s32.totalorder %s44, %s60
    %p62 = scmp.eq.s32.totalorder %s22, 0
    %p63 = por %p61, %p62
    %s65 = sadd.s32 %s64, 1
    %p68 = scmp.eq.s32.totalorder %s16, 3
    %p69 = scmp.ne.s32.totalorder %s64, %s66
    %p70 = scmp.eq.s32.totalorder %s16, 0
    %p71 = por %p69, %p70
    %p72 = scmp.ne.s32.totalorder %s64, %s66
    %p73 = scmp.eq.s32.totalorder %s21, 3
    %p74 = por %p72, %p73
    %p75 = scmp.ne.s32.totalorder %s66, %s67
    %p76 = scmp.eq.s32.totalorder %s21, 0
    %p77 = por %p75, %p76
    %p78 = scmp.ne.s32.totalorder %s66, %s67
    %p79 = scmp.eq.s32.totalorder %s22, 3
    %p80 = por %p78, %p79
    %p82 = scmp.ne.s32.totalorder %s67, %s81
    %p83 = scmp.eq.s32.totalorder %s22, 0
    %p84 = por %p82, %p83
    %s86 = sadd.s32 %s85, 1
    %p89 = scmp.eq.s32.totalorder %s16, 3
    %p90 = scmp.ne.s32.totalorder %s85, %s87
    %p91 = scmp.eq.s32.totalorder %s16, 0
    %p92 = por %p90, %p91
    %p93 = scmp.ne.s32.totalorder %s85, %s87
    %p94 = scmp.eq.s32.totalorder %s21, 3
    %p95 = por %p93, %p94
    %p96 = scmp.ne.s32.totalorder %s87, %s88
    %p97 = scmp.eq.s32.totalorder %s21, 0
    %p98 = por %p96, %p97
    %p99 = scmp.ne.s32.totalorder %s87, %s88
    %p100 = scmp.eq.s32.totalorder %s22, 3
    %p101 = por %p99, %p100
    %p103 = scmp.ne.s32.totalorder %s88, %s102
    %p104 = scmp.eq.s32.totalorder %s22, 0
    %p105 = por %p103, %p104
    %s107 = sadd.s32 %s106, 1
    %p110 = scmp.eq.s32.totalorder %s16, 3
    %p111 = scmp.ne.s32.totalorder %s106, %s108
    %p112 = scmp.eq.s32.totalorder %s16, 0
    %p113 = por %p111, %p112
    %p114 = scmp.ne.s32.totalorder %s106, %s108
    %p115 = scmp.eq.s32.totalorder %s21, 3
    %p116 = por %p114, %p115
    %p117 = scmp.ne.s32.totalorder %s108, %s109
    %p118 = scmp.eq.s32.totalorder %s21, 0
    %p119 = por %p117, %p118
    %p120 = scmp.ne.s32.totalorder %s108, %s109
    %p121 = scmp.eq.s32.totalorder %s22, 3
    %p122 = por %p120, %p121
    %p124 = scmp.ne.s32.totalorder %s109, %s123
    %p125 = scmp.eq.s32.totalorder %s22, 0
    %p126 = por %p124, %p125
    %s128 = sadd.s32 %s127, 1
    %p131 = scmp.eq.s32.totalorder %s16, 3
    %p132 = scmp.ne.s32.totalorder %s127, %s129
    %p133 = scmp.eq.s32.totalorder %s16, 0
    %p134 = por %p132, %p133
    %p135 = scmp.ne.s32.totalorder %s127, %s129
    %p136 = scmp.eq.s32.totalorder %s21, 3
    %p137 = por %p135, %p136
    %p138 = scmp.ne.s32.totalorder %s129, %s130
    %p139 = scmp.eq.s32.totalorder %s21, 0
    %p140 = por %p138, %p139
    %p141 = scmp.ne.s32.totalorder %s129, %s130
    %p142 = scmp.eq.s32.totalorder %s22, 3
    %p143 = por %p141, %p142
    %p145 = scmp.ne.s32.totalorder %s130, %s144
    %p146 = scmp.eq.s32.totalorder %s22, 0
    %p147 = por %p145, %p146
    %s149 = sadd.s32 %s148, 1
    %p152 = scmp.eq.s32.totalorder %s16, 3
    %p153 = scmp.ne.s32.totalorder %s148, %s150
    %p154 = scmp.eq.s32.totalorder %s16, 0
    %p155 = por %p153, %p154
    %p156 = scmp.ne.s32.totalorder %s148, %s150
    %p157 = scmp.eq.s32.totalorder %s21, 3
    %p158 = por %p156, %p157
    %p159 = scmp.ne.s32.totalorder %s150, %s151
    %p160 = scmp.eq.s32.totalorder %s21, 0
    %p161 = por %p159, %p160
    %p162 = scmp.ne.s32.totalorder %s150, %s151
    %p163 = scmp.eq.s32.totalorder %s22, 3
    %p164 = por %p162, %p163
    %p166 = scmp.ne.s32.totalorder %s151, %s165
    %p167 = scmp.eq.s32.totalorder %s22, 0
    %p168 = por %p166, %p167
    %s170 = sadd.s32 %s169, 1
    %p173 = scmp.eq.s32.totalorder %s16, 3
    %p174 = scmp.ne.s32.totalorder %s169, %s171
    %p175 = scmp.eq.s32.totalorder %s16, 0
    %p176 = por %p174, %p175
    %p177 = scmp.ne.s32.totalorder %s169, %s171
    %p178 = scmp.eq.s32.totalorder %s21, 3
    %p179 = por %p177, %p178
    %p180 = scmp.ne.s32.totalorder %s171, %s172
    %p181 = scmp.eq.s32.totalorder %s21, 0
    %p182 = por %p180, %p181
    %p183 = scmp.ne.s32.totalorder %s171, %s172
    %p184 = scmp.eq.s32.totalorder %s22, 3
    %p185 = por %p183, %p184
    %p187 = scmp.ne.s32.totalorder %s172, %s186
    %p188 = scmp.eq.s32.totalorder %s22, 0
    %p189 = por %p187, %p188
    %s191 = sadd.s32 %s190, 1
    %p194 = scmp.eq.s32.totalorder %s16, 3
    %p195 = scmp.ne.s32.totalorder %s190, %s192
    %p196 = scmp.eq.s32.totalorder %s16, 0
    %p197 = por %p195, %p196
    %p198 = scmp.ne.s32.totalorder %s190, %s192
    %p199 = scmp.eq.s32.totalorder %s21, 3
    %p200 = por %p198, %p199
    %p201 = scmp.ne.s32.totalorder %s192, %s193
    %p202 = scmp.eq.s32.totalorder %s21, 0
    %p203 = por %p201, %p202
    %p204 = scmp.ne.s32.totalorder %s192, %s193
    %p205 = scmp.eq.s32.totalorder %s22, 3
    %p206 = por %p204, %p205
    %p208 = scmp.ne.s32.totalorder %s193, %s207
    %p209 = scmp.eq.s32.totalorder %s22, 0
    %p210 = por %p208, %p209
    %s212 = sadd.s32 %s211, 1
    %p215 = scmp.eq.s32.totalorder %s16, 3
    %p216 = scmp.ne.s32.totalorder %s211, %s213
    %p217 = scmp.eq.s32.totalorder %s16, 0
    %p218 = por %p216, %p217
    %p219 = scmp.ne.s32.totalorder %s211, %s213
    %p220 = scmp.eq.s32.totalorder %s21, 3
    %p221 = por %p219, %p220
    %p222 = scmp.ne.s32.totalorder %s213, %s214
    %p223 = scmp.eq.s32.totalorder %s21, 0
    %p224 = por %p222, %p223
    %p225 = scmp.ne.s32.totalorder %s213, %s214
    %p226 = scmp.eq.s32.totalorder %s22, 3
    %p227 = por %p225, %p226
    %p229 = scmp.ne.s32.totalorder %s214, %s228
    %p230 = scmp.eq.s32.totalorder %s22, 0
    %p231 = por %p229, %p230
    %s233 = sadd.s32 %s232, 1
    %p236 = scmp.eq.s32.totalorder %s16, 3
    %p237 = scmp.ne.s32.totalorder %s232, %s234
    %p238 = scmp.eq.s32.totalorder %s16, 0
    %p239 = por %p237, %p238
    %p240 = scmp.ne.s32.totalorder %s232, %s234
    %p241 = scmp.eq.s32.totalorder %s21, 3
    %p242 = por %p240, %p241
    %p243 = scmp.ne.s32.totalorder %s234, %s235
    %p244 = scmp.eq.s32.totalorder %s21, 0
    %p245 = por %p243, %p244
    %p246 = scmp.ne.s32.totalorder %s234, %s235
    %p247 = scmp.eq.s32.totalorder %s22, 3
    %p248 = por %p246, %p247
    %p250 = scmp.ne.s32.totalorder %s235, %s249
    %p251 = scmp.eq.s32.totalorder %s22, 0
    %p252 = por %p250, %p251
    %s253 = ssub.s32 %s23, %s35
    %s254 = ssub.s32 %s24, %s31
    %s255 = sor.u32 %s253, %s254
    %p256 = scmp.eq.s32.totalorder %s255, 0
    %s258 = sadd.s32 %s257, 1
    %s259 = scalar_select %p256, %s257, %s258
    %p262 = pneg %p256
    %p263 = scmp.eq.s32.totalorder %s16, 3
    %p264 = por %p262, %p263
    %p265 = scmp.ne.s32.totalorder %s257, %s260
    %p266 = scmp.eq.s32.totalorder %s16, 0
    %p267 = por %p265, %p266
    %p268 = scmp.ne.s32.totalorder %s257, %s260
    %p269 = scmp.eq.s32.totalorder %s21, 3
    %p270 = por %p268, %p269
    %p271 = scmp.ne.s32.totalorder %s260, %s261
    %p272 = scmp.eq.s32.totalorder %s21, 0
    %p273 = por %p271, %p272
    %p274 = scmp.ne.s32.totalorder %s260, %s261
    %p275 = scmp.eq.s32.totalorder %s22, 3
    %p276 = por %p274, %p275
    %p278 = scmp.ne.s32.totalorder %s261, %s277
    %p279 = scmp.eq.s32.totalorder %s22, 0
    %p280 = por %p278, %p279
    %p281 = scmp.le.s32.totalorder 1, %s16
    %p282 = scmp.lt.s32.totalorder %s16, 5
    %p283 = pnand %p281, %p282
    %p284 = pneg %p283
    // Predicated region
    $region9: #{bottleneck_forward.1} parent=5 // pred_check
      _
    $region10: #{bottleneck_forward.1} parent=5 // pred_check_branch
      %286 = sbr.rel (%p283) target = $region12
    $region11: #{bottleneck_forward.1} parent=5 // pred_region
      %s287 = ssub.s32 %s16, 1
      // Predicated region
      $region13: #{bottleneck_forward.1} parent=11 // pred_check
        %p288 = pneg %p77
      $region14: #{bottleneck_forward.1} parent=11 // pred_check_branch
        %290 = sbr.rel (%p288) target = $region16
      $region15: #{bottleneck_forward.1} parent=11 // pred_region
        _
      $region16: #{bottleneck_forward.1} parent=11 // pred_fallthru
        _
      // Predicated region
      $region17: #{bottleneck_forward.1} parent=11 // pred_check
        %p291 = pneg %p98
      $region18: #{bottleneck_forward.1} parent=11 // pred_check_branch
        %293 = sbr.rel (%p291) target = $region20
      $region19: #{bottleneck_forward.1} parent=11 // pred_region
        _
      $region20: #{bottleneck_forward.1} parent=11 // pred_fallthru
        _
      // Predicated region
      $region21: #{bottleneck_forward.1} parent=11 // pred_check
        %p294 = pneg %p119
      $region22: #{bottleneck_forward.1} parent=11 // pred_check_branch
        %296 = sbr.rel (%p294) target = $region24
      $region23: #{bottleneck_forward.1} parent=11 // pred_region
        _
      $region24: #{bottleneck_forward.1} parent=11 // pred_fallthru
        _
      // Predicated region
      $region25: #{bottleneck_forward.1} parent=11 // pred_check
        %p297 = pneg %p140
      $region26: #{bottleneck_forward.1} parent=11 // pred_check_branch
        %299 = sbr.rel (%p297) target = $region28
      $region27: #{bottleneck_forward.1} parent=11 // pred_region
        _
      $region28: #{bottleneck_forward.1} parent=11 // pred_fallthru
        _
      // Predicated region
      $region29: #{bottleneck_forward.1} parent=11 // pred_check
        %p300 = pneg %p161
      $region30: #{bottleneck_forward.1} parent=11 // pred_check_branch
        %302 = sbr.rel (%p300) target = $region32
      $region31: #{bottleneck_forward.1} parent=11 // pred_region
        _
      $region32: #{bottleneck_forward.1} parent=11 // pred_fallthru
        _
      // Predicated region
      $region33: #{bottleneck_forward.1} parent=11 // pred_check
        %p303 = pneg %p182
      $region34: #{bottleneck_forward.1} parent=11 // pred_check_branch
        %305 = sbr.rel (%p303) target = $region36
      $region35: #{bottleneck_forward.1} parent=11 // pred_region
        _
      $region36: #{bottleneck_forward.1} parent=11 // pred_fallthru
        _
      // Predicated region
      $region37: #{bottleneck_forward.1} parent=11 // pred_check
        %p306 = pneg %p203
      $region38: #{bottleneck_forward.1} parent=11 // pred_check_branch
        %308 = sbr.rel (%p306) target = $region40
      $region39: #{bottleneck_forward.1} parent=11 // pred_region
        _
      $region40: #{bottleneck_forward.1} parent=11 // pred_fallthru
        _
      // Predicated region
      $region41: #{bottleneck_forward.1} parent=11 // pred_check
        %p309 = pneg %p224
      $region42: #{bottleneck_forward.1} parent=11 // pred_check_branch
        %311 = sbr.rel (%p309) target = $region44
      $region43: #{bottleneck_forward.1} parent=11 // pred_region
        _
      $region44: #{bottleneck_forward.1} parent=11 // pred_fallthru
        _
      // Predicated region
      $region45: #{bottleneck_forward.1} parent=11 // pred_check
        %p312 = pneg %p245
      $region46: #{bottleneck_forward.1} parent=11 // pred_check_branch
        %314 = sbr.rel (%p312) target = $region48
      $region47: #{bottleneck_forward.1} parent=11 // pred_region
        _
      $region48: #{bottleneck_forward.1} parent=11 // pred_fallthru
        _
    $region12: #{bottleneck_forward.1} parent=5 // pred_fallthru
      _
    %p315 = scmp.lt.s32.totalorder %s16, 4
    // Predicated region
    $region49: #{bottleneck_forward.1} parent=5 // pred_check
      %p316 = pneg %p315
    $region50: #{bottleneck_forward.1} parent=5 // pred_check_branch
      %318 = sbr.rel (%p316) target = $region52
    $region51: #{bottleneck_forward.1} parent=5 // pred_region
      // Predicated region
      $region53: #{bottleneck_forward.1} parent=51 // pred_check
        %p319 = pneg %p50
      $region54: #{bottleneck_forward.1} parent=51 // pred_check_branch
        %321 = sbr.rel (%p319) target = $region56
      $region55: #{bottleneck_forward.1} parent=51 // pred_region
        %p322 = scmp.lt.s32.totalorder %s23, 1
        %s323 = scalar_select %p322, %s23, 1
        %p324 = scmp.lt.s32.totalorder %s24, 1
        %s325 = scalar_select %p324, %s24, 1
        %s326 = smul.addr %s325, 20
        %s327 = smul.addr %s323, 40
        %s328 = sadd.s32 %s326, %s327
        %s329 = smul.addr %s328, 8
        %s330 = scalar_lea.vmem %s0, %s329
      $region56: #{bottleneck_forward.1} parent=51 // pred_fallthru
        _
    $region52: #{bottleneck_forward.1} parent=5 // pred_fallthru
      _
    %p331 = scmp.le.s32.totalorder 1, %s16
    %p332 = scmp.lt.s32.totalorder %s16, 5
    %p333 = pnand %p331, %p332
    %p334 = pneg %p333
    // Predicated region
    $region57: #{bottleneck_forward.1} parent=5 // pred_check
      _
    $region58: #{bottleneck_forward.1} parent=5 // pred_check_branch
      %336 = sbr.rel (%p333) target = $region60
    $region59: #{bottleneck_forward.1} parent=5 // pred_region
      %s337 = ssub.s32 %s16, 1
      %p338 = scmp.lt.s32.totalorder %s25, 1
      %s339 = scalar_select %p338, %s25, 1
      %p340 = scmp.lt.s32.totalorder %s26, 1
      %s341 = scalar_select %p340, %s26, 1
      %s342 = smul.addr %s341, 20
      %s343 = smul.addr %s339, 40
      %s344 = sadd.s32 %s342, %s343
      %s345 = smul.addr %s344, 8
      %s346 = scalar_lea.vmem %s0, %s345
      %p347 = pneg %p56
      %p348 = pneg %p53
      %p349 = pneg %p77
      %p350 = pneg %p74
      %p351 = pneg %p98
      %p352 = pneg %p95
      %p353 = pneg %p119
      %p354 = pneg %p116
      %p355 = pneg %p140
      %p356 = pneg %p137
      %p357 = pneg %p161
      %p358 = pneg %p158
      %p359 = pneg %p182
      %p360 = pneg %p179
      %p361 = pneg %p203
      %p362 = pneg %p200
      %p363 = pneg %p224
      %p364 = pneg %p221
      %p365 = pneg %p245
      %p366 = pneg %p242
      %p367 = pneg %p273
      %p368 = pneg %p270
      %s369 = smul.u32 8, %s26
      %p370 = scmp.lt.s32.totalorder %s25, 1
      %s371 = scalar_select %p370, %s25, 1
      %p372 = scmp.lt.s32.totalorder %s369, 15
      %s373 = scalar_select %p372, %s369, 15
      %s374 = smul.addr %s373, 2
      %s375 = smul.addr %s371, 32
      %s376 = sadd.s32 %s374, %s375
      %s377 = smul.addr %s376, 8
      %s378 = scalar_lea.vmem %s10, %s377
      %p379 = scmp.lt.s32.totalorder %s25, 1
      %s380 = scalar_select %p379, %s25, 1
      %p381 = scmp.lt.s32.totalorder %s26, 1
      %s382 = scalar_select %p381, %s26, 1
      %s383 = smul.addr %s382, 20
      %s384 = smul.addr %s380, 40
      %s385 = sadd.s32 %s383, %s384
      %s386 = smul.addr %s385, 8
      %s387 = scalar_lea.vmem %s0, %s386
      %s388 = smul.u32 8, %s26
      %p389 = scmp.lt.s32.totalorder %s25, 1
      %s390 = scalar_select %p389, %s25, 1
      %p391 = scmp.lt.s32.totalorder %s388, 15
      %s392 = scalar_select %p391, %s388, 15
      %s393 = smul.addr %s392, 2
      %s394 = smul.addr %s390, 32
      %s395 = sadd.s32 %s393, %s394
      %s396 = smul.addr %s395, 8
      %s397 = scalar_lea.vmem %s10, %s396
      %s398 = smul.u32 8, %s26
      %v400 = vld [vmem:[%s387] sm:$0xff]
      %v401 = vld [vmem:[%s387 + $0x8] sm:$0xff]
      %v402 = vld [vmem:[%s387 + $0x10] sm:$0xff]
      %v403 = vld [vmem:[%s387 + $0x18] sm:$0xff]
      %v404 = vld [vmem:[%s387 + $0x20] sm:$0xff]
      %v405 = vld [vmem:[%s387 + $0x28] sm:$0xff]
      %v406 = vld [vmem:[%s387 + $0x30] sm:$0xff]
      %v407 = vld [vmem:[%s387 + $0x38] sm:$0xff]
      %v408 = vld [vmem:[%s387 + $0x40] sm:$0xff]
      %v409 = vld [vmem:[%s387 + $0x48] sm:$0xff]
      %v410 = vld [vmem:[%s387 + $0x50] sm:$0xff]
      %v411 = vld [vmem:[%s387 + $0x58] sm:$0xff]
      %v412 = vld [vmem:[%s387 + $0x60] sm:$0xff]
      %v413 = vld [vmem:[%s387 + $0x68] sm:$0xff]
      %v414 = vld [vmem:[%s387 + $0x70] sm:$0xff]
      %v415 = vld [vmem:[%s387 + $0x78] sm:$0xff]
      %v416 = vld [vmem:[%s387 + $0x80] sm:$0xff]
      %v417 = vld [vmem:[%s387 + $0x88] sm:$0xff]
      %v418 = vld [vmem:[%s387 + $0x90] sm:$0xff]
      %v419 = vld [vmem:[%s387 + $0x98] sm:$0xff]
      %v420 = vpack.c.bf16 %v401, %v400
      %v421 = vpack.c.bf16 %v403, %v402
      %v422 = vpack.c.bf16 %v405, %v404
      %v423 = vpack.c.bf16 %v407, %v406
      %v424 = vpack.c.bf16 %v409, %v408
      %v425 = vpack.c.bf16 %v411, %v410
      %v426 = vpack.c.bf16 %v413, %v412
      %v427 = vpack.c.bf16 %v415, %v414
      %v428 = vpack.c.bf16 %v417, %v416
      %v429 = vpack.c.bf16 %v419, %v418
      %v430 = vld [vmem:[%s1] sm:$0xf]
      %v431 = vld [vmem:[%s1 + $0x4] sm:$0xf]
      %v432 = vld [vmem:[%s1 + $0x8] sm:$0xf]
      %v433 = vld [vmem:[%s1 + $0xc] sm:$0xf]
      %v434 = vld [vmem:[%s1 + $0x10] sm:$0xf]
      %v435 = vld [vmem:[%s1 + $0x14] sm:$0xf]
      %v436 = vld [vmem:[%s1 + $0x18] sm:$0xf]
      %v437 = vld [vmem:[%s1 + $0x1c] sm:$0xf]
      %v438 = vld [vmem:[%s1 + $0x20] sm:$0xf]
      %v439 = vld [vmem:[%s1 + $0x24] sm:$0xf]
      %v440 = vld [vmem:[%s1 + $0x28] sm:$0xf]
      %v441 = vld [vmem:[%s1 + $0x2c] sm:$0xf]
      %v442 = vld [vmem:[%s1 + $0x30] sm:$0xf]
      %v443 = vld [vmem:[%s1 + $0x34] sm:$0xf]
      %v444 = vld [vmem:[%s1 + $0x38] sm:$0xf]
      %v445 = vld [vmem:[%s1 + $0x3c] sm:$0xf]
      %v462 = vunpack.c.l.b16 %v430
      %v463 = vunpack.c.l.b16 %v431
      %v464 = vunpack.c.l.b16 %v432
      %v465 = vunpack.c.l.b16 %v433
      %v466 = vunpack.c.l.b16 %v434
      %v467 = vunpack.c.l.b16 %v435
      %v468 = vunpack.c.l.b16 %v436
      %v469 = vunpack.c.l.b16 %v437
      %v470 = vunpack.c.l.b16 %v438
      %v471 = vunpack.c.l.b16 %v439
      %v472 = vunpack.c.l.b16 %v440
      %v473 = vunpack.c.l.b16 %v441
      %v474 = vunpack.c.l.b16 %v442
      %v475 = vunpack.c.l.b16 %v443
      %v476 = vunpack.c.l.b16 %v444
      %v477 = vunpack.c.l.b16 %v445
      %v478 = vpack.c.b16 %v463, %v462
      %v479 = vpack.c.b16 %v465, %v464
      %v480 = vpack.c.b16 %v467, %v466
      %v481 = vpack.c.b16 %v469, %v468
      %v482 = vpack.c.b16 %v471, %v470
      %v483 = vpack.c.b16 %v473, %v472
      %v484 = vpack.c.b16 %v475, %v474
      %v485 = vpack.c.b16 %v477, %v476
      %494 = vmatprep.subr.bf16.mxu0 0
      %495 = vmatpush1.bf16.msra.mxu0 %v478
      %496 = vmatprep.subr.bf16.mxu0 0
      %497 = vmatpush1.bf16.msra.mxu0 %v479
      %498 = vmatprep.subr.bf16.mxu0 0
      %499 = vmatpush1.bf16.msra.mxu0 %v480
      %500 = vmatprep.subr.bf16.mxu0 0
      %501 = vmatpush1.bf16.msra.mxu0 %v481
      %502 = vmatprep.subr.bf16.mxu0 0
      %503 = vmatpush1.bf16.msra.mxu0 %v482
      %504 = vmatprep.subr.bf16.mxu0 0
      %505 = vmatpush1.bf16.msra.mxu0 %v483
      %506 = vmatprep.subr.bf16.mxu0 0
      %507 = vmatpush1.bf16.msra.mxu0 %v484
      %508 = vmatprep.subr.bf16.mxu0 0
      %509 = vmatpush1.bf16.msra.mxu0 %v485
      %510 = vmatprep.subr.bf16.mxu0 0
      %511 = vmatpush1.bf16.msra.mxu0 0
      %512 = vmatprep.subr.bf16.mxu0 0
      %513 = vmatpush1.bf16.msra.mxu0 0
      %514 = vmatprep.subr.bf16.mxu0 0
      %515 = vmatpush1.bf16.msra.mxu0 0
      %516 = vmatprep.subr.bf16.mxu0 0
      %517 = vmatpush1.bf16.msra.mxu0 0
      %518 = vmatprep.subr.bf16.mxu0 0
      %519 = vmatpush1.bf16.msra.mxu0 0
      %520 = vmatprep.subr.bf16.mxu0 0
      %521 = vmatpush1.bf16.msra.mxu0 0
      %522 = vmatprep.subr.bf16.mxu0 0
      %523 = vmatpush1.bf16.msra.mxu0 0
      %524 = vmatprep.subr.bf16.mxu0 0
      %525 = vmatpush1.bf16.msra.mxu0 0
      %526 = vmatprep.mubr.bf16.mxu0 0
      %527 = vmatmul.mubr.bf16.gmra.mrb[0].mxu0 %v420
      %v528 = vpop.f32.mrb[0].mxu0
      %v529 = vadd.f32 0.0, %v528
      %v530 = vpop.f32.mrb[0].mxu0
      %v531 = vpop.f32.mrb[0].mxu0
      %v532 = vadd.f32 0.0, %v531
      %v533 = vpop.f32.mrb[0].mxu0
      %534 = vmatprep.mubr.bf16.mxu0 0
      %535 = vmatmul.mubr.bf16.gmra.mrb[0].mxu0 %v421
      %v536 = vpop.f32.mrb[0].mxu0
      %v537 = vadd.f32 0.0, %v536
      %v538 = vpop.f32.mrb[0].mxu0
      %v539 = vpop.f32.mrb[0].mxu0
      %v540 = vadd.f32 0.0, %v539
      %v541 = vpop.f32.mrb[0].mxu0
      %542 = vmatprep.mubr.bf16.mxu0 0
      %543 = vmatmul.mubr.bf16.gmra.mrb[0].mxu0 %v422
      %v544 = vpop.f32.mrb[0].mxu0
      %v545 = vadd.f32 0.0, %v544
      %v546 = vpop.f32.mrb[0].mxu0
      %v547 = vpop.f32.mrb[0].mxu0
      %v548 = vadd.f32 0.0, %v547
      %v549 = vpop.f32.mrb[0].mxu0
      %550 = vmatprep.mubr.bf16.mxu0 0
      %551 = vmatmul.mubr.bf16.gmra.mrb[0].mxu0 %v423
      %v552 = vpop.f32.mrb[0].mxu0
      %v553 = vadd.f32 0.0, %v552
      %v554 = vpop.f32.mrb[0].mxu0
      %v555 = vpop.f32.mrb[0].mxu0
      %v556 = vadd.f32 0.0, %v555
      %v557 = vpop.f32.mrb[0].mxu0
      %558 = vmatprep.mubr.bf16.mxu0 0
      %559 = vmatmul.mubr.bf16.gmra.mrb[0].mxu0 %v424
      %v560 = vpop.f32.mrb[0].mxu0
      %v561 = vadd.f32 0.0, %v560
      %v562 = vpop.f32.mrb[0].mxu0
      %v563 = vpop.f32.mrb[0].mxu0
      %v564 = vadd.f32 0.0, %v563
      %v565 = vpop.f32.mrb[0].mxu0
      %566 = vmatprep.mubr.bf16.mxu0 0
      %567 = vmatmul.mubr.bf16.gmra.mrb[0].mxu0 %v425
      %v568 = vpop.f32.mrb[0].mxu0
      %v569 = vadd.f32 0.0, %v568
      %v570 = vpop.f32.mrb[0].mxu0
      %v571 = vpop.f32.mrb[0].mxu0
      %v572 = vadd.f32 0.0, %v571
      %v573 = vpop.f32.mrb[0].mxu0
      %574 = vmatprep.mubr.bf16.mxu0 0
      %575 = vmatmul.mubr.bf16.gmra.mrb[0].mxu0 %v426
      %v576 = vpop.f32.mrb[0].mxu0
      %v577 = vadd.f32 0.0, %v576
      %v578 = vpop.f32.mrb[0].mxu0
      %v579 = vpop.f32.mrb[0].mxu0
      %v580 = vadd.f32 0.0, %v579
      %v581 = vpop.f32.mrb[0].mxu0
      %582 = vmatprep.mubr.bf16.mxu0 0
      %583 = vmatmul.mubr.bf16.gmra.mrb[0].mxu0 %v427
      %v584 = vpop.f32.mrb[0].mxu0
      %v585 = vadd.f32 0.0, %v584
      %v586 = vpop.f32.mrb[0].mxu0
      %v587 = vpop.f32.mrb[0].mxu0
      %v588 = vadd.f32 0.0, %v587
      %v589 = vpop.f32.mrb[0].mxu0
      %590 = vmatprep.mubr.bf16.mxu0 0
      %591 = vmatmul.mubr.bf16.gmra.mrb[0].mxu0 %v428
      %v592 = vpop.f32.mrb[0].mxu0
      %v593 = vadd.f32 0.0, %v592
      %v594 = vpop.f32.mrb[0].mxu0
      %v595 = vpop.f32.mrb[0].mxu0
      %v596 = vadd.f32 0.0, %v595
      %v597 = vpop.f32.mrb[0].mxu0
      %598 = vmatprep.mubr.bf16.mxu0 0
      %599 = vmatmul.mubr.bf16.gmra.mrb[0].mxu0 %v429
      %v600 = vpop.f32.mrb[0].mxu0
      %v601 = vadd.f32 0.0, %v600
      %v602 = vpop.f32.mrb[0].mxu0
      %v603 = vpop.f32.mrb[0].mxu0
      %v604 = vadd.f32 0.0, %v603
      %v605 = vpop.f32.mrb[0].mxu0
      %606 = vdwg.mxu0
      %v607 = vld [vmem:[%s2] sm:$0x1]
      %v609 = vlaneseq
      %v610 = vshrl.u32 %v609, 7
      %v611 = vsub.s32 0, %v610
      %v612 = vrot.slane %v607, %v611
      %v614 = vmul.f32 %v529, %v612
      %v615 = vmul.f32 %v532, %v612
      %v616 = vmul.f32 %v537, %v612
      %v617 = vmul.f32 %v540, %v612
      %v618 = vmul.f32 %v545, %v612
      %v619 = vmul.f32 %v548, %v612
      %v620 = vmul.f32 %v553, %v612
      %v621 = vmul.f32 %v556, %v612
      %v622 = vmul.f32 %v561, %v612
      %v623 = vmul.f32 %v564, %v612
      %v624 = vmul.f32 %v569, %v612
      %v625 = vmul.f32 %v572, %v612
      %v626 = vmul.f32 %v577, %v612
      %v627 = vmul.f32 %v580, %v612
      %v628 = vmul.f32 %v585, %v612
      %v629 = vmul.f32 %v588, %v612
      %v630 = vmul.f32 %v593, %v612
      %v631 = vmul.f32 %v596, %v612
      %v632 = vmul.f32 %v601, %v612
      %v633 = vmul.f32 %v604, %v612
      %v634 = vld [vmem:[%s3] sm:$0x1]
      %v636 = vlaneseq
      %v637 = vshrl.u32 %v636, 7
      %v638 = vsub.s32 0, %v637
      %v639 = vrot.slane %v634, %v638
      %v641 = vadd.f32 %v614, %v639
      %v642 = vadd.f32 %v615, %v639
      %v643 = vadd.f32 %v616, %v639
      %v644 = vadd.f32 %v617, %v639
      %v645 = vadd.f32 %v618, %v639
      %v646 = vadd.f32 %v619, %v639
      %v647 = vadd.f32 %v620, %v639
      %v648 = vadd.f32 %v621, %v639
      %v649 = vadd.f32 %v622, %v639
      %v650 = vadd.f32 %v623, %v639
      %v651 = vadd.f32 %v624, %v639
      %v652 = vadd.f32 %v625, %v639
      %v653 = vadd.f32 %v626, %v639
      %v654 = vadd.f32 %v627, %v639
      %v655 = vadd.f32 %v628, %v639
      %v656 = vadd.f32 %v629, %v639
      %v657 = vadd.f32 %v630, %v639
      %v658 = vadd.f32 %v631, %v639
      %v659 = vadd.f32 %v632, %v639
      %v660 = vadd.f32 %v633, %v639
      %v661 = vmax.f32 %v641, 0.0
      %v662 = vmax.f32 %v642, 0.0
      %v663 = vmax.f32 %v643, 0.0
      %v664 = vmax.f32 %v644, 0.0
      %v665 = vmax.f32 %v645, 0.0
      %v666 = vmax.f32 %v646, 0.0
      %v667 = vmax.f32 %v647, 0.0
      %v668 = vmax.f32 %v648, 0.0
      %v669 = vmax.f32 %v649, 0.0
      %v670 = vmax.f32 %v650, 0.0
      %v671 = vmax.f32 %v651, 0.0
      %v672 = vmax.f32 %v652, 0.0
      %v673 = vmax.f32 %v653, 0.0
      %v674 = vmax.f32 %v654, 0.0
      %v675 = vmax.f32 %v655, 0.0
      %v676 = vmax.f32 %v656, 0.0
      %v677 = vmax.f32 %v657, 0.0
      %v678 = vmax.f32 %v658, 0.0
      %v679 = vmax.f32 %v659, 0.0
      %v680 = vmax.f32 %v660, 0.0
      %s681 = smul.u32 %s26, 8
      %v682 = vstv %s681
      %v683 = vadd.s32 %v682, 1
      %v684 = vadd.s32 %v682, 2
      %v685 = vadd.s32 %v682, 3
      %v686 = vadd.s32 %v682, 4
      %v687 = vadd.s32 %v682, 5
      %v688 = vadd.s32 %v682, 6
      %v689 = vadd.s32 %v682, 7
      %v690 = vadd.s32 %v682, 8
      %v691 = vadd.s32 %v682, 9
      %vm692 = vcmp.ge.s32.totalorder %v682, 1
      %vm693 = vcmp.ge.s32.totalorder %v683, 1
      %vm694 = vcmp.ge.s32.totalorder %v684, 1
      %vm695 = vcmp.ge.s32.totalorder %v685, 1
      %vm696 = vcmp.ge.s32.totalorder %v686, 1
      %vm697 = vcmp.ge.s32.totalorder %v687, 1
      %vm698 = vcmp.ge.s32.totalorder %v688, 1
      %vm699 = vcmp.ge.s32.totalorder %v689, 1
      %vm700 = vcmp.ge.s32.totalorder %v690, 1
      %vm701 = vcmp.ge.s32.totalorder %v691, 1
      %vm702 = vcmp.le.s32.totalorder %v682, 16
      %vm703 = vcmp.le.s32.totalorder %v683, 16
      %vm704 = vcmp.le.s32.totalorder %v684, 16
      %vm705 = vcmp.le.s32.totalorder %v685, 16
      %vm706 = vcmp.le.s32.totalorder %v686, 16
      %vm707 = vcmp.le.s32.totalorder %v687, 16
      %vm708 = vcmp.le.s32.totalorder %v688, 16
      %vm709 = vcmp.le.s32.totalorder %v689, 16
      %vm710 = vcmp.le.s32.totalorder %v690, 16
      %vm711 = vcmp.le.s32.totalorder %v691, 16
      %vm712 = vmand %vm692, %vm702
      %vm713 = vmand %vm693, %vm703
      %vm714 = vmand %vm694, %vm704
      %vm715 = vmand %vm695, %vm705
      %vm716 = vmand %vm696, %vm706
      %vm717 = vmand %vm697, %vm707
      %vm718 = vmand %vm698, %vm708
      %vm719 = vmand %vm699, %vm709
      %vm720 = vmand %vm700, %vm710
      %vm721 = vmand %vm701, %vm711
      %v722 = vsel %vm712, 1, 0
      %v723 = vsel %vm713, 1, 0
      %v724 = vsel %vm714, 1, 0
      %v725 = vsel %vm715, 1, 0
      %v726 = vsel %vm716, 1, 0
      %v727 = vsel %vm717, 1, 0
      %v728 = vsel %vm718, 1, 0
      %v729 = vsel %vm719, 1, 0
      %v730 = vsel %vm720, 1, 0
      %v731 = vsel %vm721, 1, 0
      %vm732 = vcmp.eq.s32.totalorder %v722, 1
      %vm733 = vcmp.eq.s32.totalorder %v723, 1
      %vm734 = vcmp.eq.s32.totalorder %v724, 1
      %vm735 = vcmp.eq.s32.totalorder %v725, 1
      %vm736 = vcmp.eq.s32.totalorder %v726, 1
      %vm737 = vcmp.eq.s32.totalorder %v727, 1
      %vm738 = vcmp.eq.s32.totalorder %v728, 1
      %vm739 = vcmp.eq.s32.totalorder %v729, 1
      %vm740 = vcmp.eq.s32.totalorder %v730, 1
      %vm741 = vcmp.eq.s32.totalorder %v731, 1
      %v742 = vsel %vm732, %v661, 0.0
      %v743 = vsel %vm732, %v662, 0.0
      %v744 = vsel %vm733, %v663, 0.0
      %v745 = vsel %vm733, %v664, 0.0
      %v746 = vsel %vm734, %v665, 0.0
      %v747 = vsel %vm734, %v666, 0.0
      %v748 = vsel %vm735, %v667, 0.0
      %v749 = vsel %vm735, %v668, 0.0
      %v750 = vsel %vm736, %v669, 0.0
      %v751 = vsel %vm736, %v670, 0.0
      %v752 = vsel %vm737, %v671, 0.0
      %v753 = vsel %vm737, %v672, 0.0
      %v754 = vsel %vm738, %v673, 0.0
      %v755 = vsel %vm738, %v674, 0.0
      %v756 = vsel %vm739, %v675, 0.0
      %v757 = vsel %vm739, %v676, 0.0
      %v758 = vsel %vm740, %v677, 0.0
      %v759 = vsel %vm740, %v678, 0.0
      %v760 = vsel %vm741, %v679, 0.0
      %v761 = vsel %vm741, %v680, 0.0
      %762 = vst [vmem:[#allocation2] sm:$0x1] 0.0
      %763 = vst [vmem:[#allocation2 + $0x18] sm:$0x1] 0.0
      %764 = vst [vmem:[#allocation2 + $0x30] sm:$0x1] 0.0
      %765 = vst [vmem:[#allocation2 + $0x48] sm:$0x1] 0.0
      %766 = vst [vmem:[#allocation2 + $0x60] sm:$0x1] 0.0
      %767 = vst [vmem:[#allocation2 + $0x78] sm:$0x1] 0.0
      %768 = vst [vmem:[#allocation2 + $0x90] sm:$0x1] 0.0
      %769 = vst [vmem:[#allocation2 + $0xa8] sm:$0x1] 0.0
      %770 = vst [vmem:[#allocation2 + $0xc0] sm:$0x1] 0.0
      %771 = vst [vmem:[#allocation2 + $0xd8] sm:$0x1] 0.0
      %772 = vst [vmem:[#allocation2 + $0x11] sm:$0x1] 0.0
      %773 = vst [vmem:[#allocation2 + $0x29] sm:$0x1] 0.0
      %774 = vst [vmem:[#allocation2 + $0x41] sm:$0x1] 0.0
      %775 = vst [vmem:[#allocation2 + $0x59] sm:$0x1] 0.0
      %776 = vst [vmem:[#allocation2 + $0x71] sm:$0x1] 0.0
      %777 = vst [vmem:[#allocation2 + $0x89] sm:$0x1] 0.0
      %778 = vst [vmem:[#allocation2 + $0xa1] sm:$0x1] 0.0
      %779 = vst [vmem:[#allocation2 + $0xb9] sm:$0x1] 0.0
      %780 = vst [vmem:[#allocation2 + $0xd1] sm:$0x1] 0.0
      %781 = vst [vmem:[#allocation2 + $0xe9] sm:$0x1] 0.0
      %782 = vst [vmem:[#allocation2 + $0x1] sm:$0xff] %v742
      %783 = vst [vmem:[#allocation2 + $0x9] sm:$0xff] %v743
      %784 = vst [vmem:[#allocation2 + $0x19] sm:$0xff] %v744
      %785 = vst [vmem:[#allocation2 + $0x21] sm:$0xff] %v745
      %786 = vst [vmem:[#allocation2 + $0x31] sm:$0xff] %v746
      %787 = vst [vmem:[#allocation2 + $0x39] sm:$0xff] %v747
      %788 = vst [vmem:[#allocation2 + $0x49] sm:$0xff] %v748
      %789 = vst [vmem:[#allocation2 + $0x51] sm:$0xff] %v749
      %790 = vst [vmem:[#allocation2 + $0x61] sm:$0xff] %v750
      %791 = vst [vmem:[#allocation2 + $0x69] sm:$0xff] %v751
      %792 = vst [vmem:[#allocation2 + $0x79] sm:$0xff] %v752
      %793 = vst [vmem:[#allocation2 + $0x81] sm:$0xff] %v753
      %794 = vst [vmem:[#allocation2 + $0x91] sm:$0xff] %v754
      %795 = vst [vmem:[#allocation2 + $0x99] sm:$0xff] %v755
      %796 = vst [vmem:[#allocation2 + $0xa9] sm:$0xff] %v756
      %797 = vst [vmem:[#allocation2 + $0xb1] sm:$0xff] %v757
      %798 = vst [vmem:[#allocation2 + $0xc1] sm:$0xff] %v758
      %799 = vst [vmem:[#allocation2 + $0xc9] sm:$0xff] %v759
      %800 = vst [vmem:[#allocation2 + $0xd9] sm:$0xff] %v760
      %801 = vst [vmem:[#allocation2 + $0xe1] sm:$0xff] %v761
      %v802 = vld [vmem:[#allocation2] sm:$0xff]
      %v803 = vld [vmem:[#allocation2 + $0x8] sm:$0xff]
      %v804 = vld [vmem:[#allocation2 + $0x18] sm:$0xff]
      %v805 = vld [vmem:[#allocation2 + $0x20] sm:$0xff]
      %v806 = vld [vmem:[#allocation2 + $0x30] sm:$0xff]
      %v807 = vld [vmem:[#allocation2 + $0x38] sm:$0xff]
      %v808 = vld [vmem:[#allocation2 + $0x48] sm:$0xff]
      %v809 = vld [vmem:[#allocation2 + $0x50] sm:$0xff]
      %v810 = vld [vmem:[#allocation2 + $0x60] sm:$0xff]
      %v811 = vld [vmem:[#allocation2 + $0x68] sm:$0xff]
      %v812 = vld [vmem:[#allocation2 + $0x78] sm:$0xff]
      %v813 = vld [vmem:[#allocation2 + $0x80] sm:$0xff]
      %v814 = vld [vmem:[#allocation2 + $0x90] sm:$0xff]
      %v815 = vld [vmem:[#allocation2 + $0x98] sm:$0xff]
      %v816 = vld [vmem:[#allocation2 + $0xa8] sm:$0xff]
      %v817 = vld [vmem:[#allocation2 + $0xb0] sm:$0xff]
      %v818 = vld [vmem:[#allocation2 + $0x1] sm:$0xff]
      %v819 = vld [vmem:[#allocation2 + $0x9] sm:$0xff]
      %v820 = vld [vmem:[#allocation2 + $0x19] sm:$0xff]
      %v821 = vld [vmem:[#allocation2 + $0x21] sm:$0xff]
      %v822 = vld [vmem:[#allocation2 + $0x31] sm:$0xff]
      %v823 = vld [vmem:[#allocation2 + $0x39] sm:$0xff]
      %v824 = vld [vmem:[#allocation2 + $0x49] sm:$0xff]
      %v825 = vld [vmem:[#allocation2 + $0x51] sm:$0xff]
      %v826 = vld [vmem:[#allocation2 + $0x61] sm:$0xff]
      %v827 = vld [vmem:[#allocation2 + $0x69] sm:$0xff]
      %v828 = vld [vmem:[#allocation2 + $0x79] sm:$0xff]
      %v829 = vld [vmem:[#allocation2 + $0x81] sm:$0xff]
      %v830 = vld [vmem:[#allocation2 + $0x91] sm:$0xff]
      %v831 = vld [vmem:[#allocation2 + $0x99] sm:$0xff]
      %v832 = vld [vmem:[#allocation2 + $0xa9] sm:$0xff]
      %v833 = vld [vmem:[#allocation2 + $0xb1] sm:$0xff]
      %v834 = vld [vmem:[#allocation2 + $0x2] sm:$0xff]
      %v835 = vld [vmem:[#allocation2 + $0xa] sm:$0xff]
      %v836 = vld [vmem:[#allocation2 + $0x1a] sm:$0xff]
      %v837 = vld [vmem:[#allocation2 + $0x22] sm:$0xff]
      %v838 = vld [vmem:[#allocation2 + $0x32] sm:$0xff]
      %v839 = vld [vmem:[#allocation2 + $0x3a] sm:$0xff]
      %v840 = vld [vmem:[#allocation2 + $0x4a] sm:$0xff]
      %v841 = vld [vmem:[#allocation2 + $0x52] sm:$0xff]
      %v842 = vld [vmem:[#allocation2 + $0x62] sm:$0xff]
      %v843 = vld [vmem:[#allocation2 + $0x6a] sm:$0xff]
      %v844 = vld [vmem:[#allocation2 + $0x7a] sm:$0xff]
      %v845 = vld [vmem:[#allocation2 + $0x82] sm:$0xff]
      %v846 = vld [vmem:[#allocation2 + $0x92] sm:$0xff]
      %v847 = vld [vmem:[#allocation2 + $0x9a] sm:$0xff]
      %v848 = vld [vmem:[#allocation2 + $0xaa] sm:$0xff]
      %v849 = vld [vmem:[#allocation2 + $0xb2] sm:$0xff]
      %s850 = scalar_lea.vmem [#allocation2], 24
      %v851 = vld [vmem:[%s850] sm:$0xff]
      %v852 = vld [vmem:[%s850 + $0x8] sm:$0xff]
      %v853 = vld [vmem:[%s850 + $0x18] sm:$0xff]
      %v854 = vld [vmem:[%s850 + $0x20] sm:$0xff]
      %v855 = vld [vmem:[%s850 + $0x30] sm:$0xff]
      %v856 = vld [vmem:[%s850 + $0x38] sm:$0xff]
      %v857 = vld [vmem:[%s850 + $0x48] sm:$0xff]
      %v858 = vld [vmem:[%s850 + $0x50] sm:$0xff]
      %v859 = vld [vmem:[%s850 + $0x60] sm:$0xff]
      %v860 = vld [vmem:[%s850 + $0x68] sm:$0xff]
      %v861 = vld [vmem:[%s850 + $0x78] sm:$0xff]
      %v862 = vld [vmem:[%s850 + $0x80] sm:$0xff]
      %v863 = vld [vmem:[%s850 + $0x90] sm:$0xff]
      %v864 = vld [vmem:[%s850 + $0x98] sm:$0xff]
      %v865 = vld [vmem:[%s850 + $0xa8] sm:$0xff]
      %v866 = vld [vmem:[%s850 + $0xb0] sm:$0xff]
      %v867 = vld [vmem:[%s850 + $0x1] sm:$0xff]
      %v868 = vld [vmem:[%s850 + $0x9] sm:$0xff]
      %v869 = vld [vmem:[%s850 + $0x19] sm:$0xff]
      %v870 = vld [vmem:[%s850 + $0x21] sm:$0xff]
      %v871 = vld [vmem:[%s850 + $0x31] sm:$0xff]
      %v872 = vld [vmem:[%s850 + $0x39] sm:$0xff]
      %v873 = vld [vmem:[%s850 + $0x49] sm:$0xff]
      %v874 = vld [vmem:[%s850 + $0x51] sm:$0xff]
      %v875 = vld [vmem:[%s850 + $0x61] sm:$0xff]
      %v876 = vld [vmem:[%s850 + $0x69] sm:$0xff]
      %v877 = vld [vmem:[%s850 + $0x79] sm:$0xff]
      %v878 = vld [vmem:[%s850 + $0x81] sm:$0xff]
      %v879 = vld [vmem:[%s850 + $0x91] sm:$0xff]
      %v880 = vld [vmem:[%s850 + $0x99] sm:$0xff]
      %v881 = vld [vmem:[%s850 + $0xa9] sm:$0xff]
      %v882 = vld [vmem:[%s850 + $0xb1] sm:$0xff]
      %v883 = vld [vmem:[%s850 + $0x2] sm:$0xff]
      %v884 = vld [vmem:[%s850 + $0xa] sm:$0xff]
      %v885 = vld [vmem:[%s850 + $0x1a] sm:$0xff]
      %v886 = vld [vmem:[%s850 + $0x22] sm:$0xff]
      %v887 = vld [vmem:[%s850 + $0x32] sm:$0xff]
      %v888 = vld [vmem:[%s850 + $0x3a] sm:$0xff]
      %v889 = vld [vmem:[%s850 + $0x4a] sm:$0xff]
      %v890 = vld [vmem:[%s850 + $0x52] sm:$0xff]
      %v891 = vld [vmem:[%s850 + $0x62] sm:$0xff]
      %v892 = vld [vmem:[%s850 + $0x6a] sm:$0xff]
      %v893 = vld [vmem:[%s850 + $0x7a] sm:$0xff]
      %v894 = vld [vmem:[%s850 + $0x82] sm:$0xff]
      %v895 = vld [vmem:[%s850 + $0x92] sm:$0xff]
      %v896 = vld [vmem:[%s850 + $0x9a] sm:$0xff]
      %v897 = vld [vmem:[%s850 + $0xaa] sm:$0xff]
      %v898 = vld [vmem:[%s850 + $0xb2] sm:$0xff]
      %s899 = scalar_lea.vmem [#allocation2], 48
      %v900 = vld [vmem:[%s899] sm:$0xff]
      %v901 = vld [vmem:[%s899 + $0x8] sm:$0xff]
      %v902 = vld [vmem:[%s899 + $0x18] sm:$0xff]
      %v903 = vld [vmem:[%s899 + $0x20] sm:$0xff]
      %v904 = vld [vmem:[%s899 + $0x30] sm:$0xff]
      %v905 = vld [vmem:[%s899 + $0x38] sm:$0xff]
      %v906 = vld [vmem:[%s899 + $0x48] sm:$0xff]
      %v907 = vld [vmem:[%s899 + $0x50] sm:$0xff]
      %v908 = vld [vmem:[%s899 + $0x60] sm:$0xff]
      %v909 = vld [vmem:[%s899 + $0x68] sm:$0xff]
      %v910 = vld [vmem:[%s899 + $0x78] sm:$0xff]
      %v911 = vld [vmem:[%s899 + $0x80] sm:$0xff]
      %v912 = vld [vmem:[%s899 + $0x90] sm:$0xff]
      %v913 = vld [vmem:[%s899 + $0x98] sm:$0xff]
      %v914 = vld [vmem:[%s899 + $0xa8] sm:$0xff]
      %v915 = vld [vmem:[%s899 + $0xb0] sm:$0xff]
      %v916 = vld [vmem:[%s899 + $0x1] sm:$0xff]
      %v917 = vld [vmem:[%s899 + $0x9] sm:$0xff]
      %v918 = vld [vmem:[%s899 + $0x19] sm:$0xff]
      %v919 = vld [vmem:[%s899 + $0x21] sm:$0xff]
      %v920 = vld [vmem:[%s899 + $0x31] sm:$0xff]
      %v921 = vld [vmem:[%s899 + $0x39] sm:$0xff]
      %v922 = vld [vmem:[%s899 + $0x49] sm:$0xff]
      %v923 = vld [vmem:[%s899 + $0x51] sm:$0xff]
      %v924 = vld [vmem:[%s899 + $0x61] sm:$0xff]
      %v925 = vld [vmem:[%s899 + $0x69] sm:$0xff]
      %v926 = vld [vmem:[%s899 + $0x79] sm:$0xff]
      %v927 = vld [vmem:[%s899 + $0x81] sm:$0xff]
      %v928 = vld [vmem:[%s899 + $0x91] sm:$0xff]
      %v929 = vld [vmem:[%s899 + $0x99] sm:$0xff]
      %v930 = vld [vmem:[%s899 + $0xa9] sm:$0xff]
      %v931 = vld [vmem:[%s899 + $0xb1] sm:$0xff]
      %v932 = vld [vmem:[%s899 + $0x2] sm:$0xff]
      %v933 = vld [vmem:[%s899 + $0xa] sm:$0xff]
      %v934 = vld [vmem:[%s899 + $0x1a] sm:$0xff]
      %v935 = vld [vmem:[%s899 + $0x22] sm:$0xff]
      %v936 = vld [vmem:[%s899 + $0x32] sm:$0xff]
      %v937 = vld [vmem:[%s899 + $0x3a] sm:$0xff]
      %v938 = vld [vmem:[%s899 + $0x4a] sm:$0xff]
      %v939 = vld [vmem:[%s899 + $0x52] sm:$0xff]
      %v940 = vld [vmem:[%s899 + $0x62] sm:$0xff]
      %v941 = vld [vmem:[%s899 + $0x6a] sm:$0xff]
      %v942 = vld [vmem:[%s899 + $0x7a] sm:$0xff]
      %v943 = vld [vmem:[%s899 + $0x82] sm:$0xff]
      %v944 = vld [vmem:[%s899 + $0x92] sm:$0xff]
      %v945 = vld [vmem:[%s899 + $0x9a] sm:$0xff]
      %v946 = vld [vmem:[%s899 + $0xaa] sm:$0xff]
      %v947 = vld [vmem:[%s899 + $0xb2] sm:$0xff]
      %v948 = vpack.c.bf16 %v803, %v802
      %v949 = vpack.c.bf16 %v819, %v818
      %v950 = vpack.c.bf16 %v835, %v834
      %v951 = vpack.c.bf16 %v852, %v851
      %v952 = vpack.c.bf16 %v868, %v867
      %v953 = vpack.c.bf16 %v884, %v883
      %v954 = vpack.c.bf16 %v901, %v900
      %v955 = vpack.c.bf16 %v917, %v916
      %v956 = vpack.c.bf16 %v933, %v932
      %v957 = vpack.c.bf16 %v805, %v804
      %v958 = vpack.c.bf16 %v821, %v820
      %v959 = vpack.c.bf16 %v837, %v836
      %v960 = vpack.c.bf16 %v854, %v853
      %v961 = vpack.c.bf16 %v870, %v869
      %v962 = vpack.c.bf16 %v886, %v885
      %v963 = vpack.c.bf16 %v903, %v902
      %v964 = vpack.c.bf16 %v919, %v918
      %v965 = vpack.c.bf16 %v935, %v934
      %v966 = vpack.c.bf16 %v807, %v806
      %v967 = vpack.c.bf16 %v823, %v822
      %v968 = vpack.c.bf16 %v839, %v838
      %v969 = vpack.c.bf16 %v856, %v855
      %v970 = vpack.c.bf16 %v872, %v871
      %v971 = vpack.c.bf16 %v888, %v887
      %v972 = vpack.c.bf16 %v905, %v904
      %v973 = vpack.c.bf16 %v921, %v920
      %v974 = vpack.c.bf16 %v937, %v936
      %v975 = vpack.c.bf16 %v809, %v808
      %v976 = vpack.c.bf16 %v825, %v824
      %v977 = vpack.c.bf16 %v841, %v840
      %v978 = vpack.c.bf16 %v858, %v857
      %v979 = vpack.c.bf16 %v874, %v873
      %v980 = vpack.c.bf16 %v890, %v889
      %v981 = vpack.c.bf16 %v907, %v906
      %v982 = vpack.c.bf16 %v923, %v922
      %v983 = vpack.c.bf16 %v939, %v938
      %v984 = vpack.c.bf16 %v811, %v810
      %v985 = vpack.c.bf16 %v827, %v826
      %v986 = vpack.c.bf16 %v843, %v842
      %v987 = vpack.c.bf16 %v860, %v859
      %v988 = vpack.c.bf16 %v876, %v875
      %v989 = vpack.c.bf16 %v892, %v891
      %v990 = vpack.c.bf16 %v909, %v908
      %v991 = vpack.c.bf16 %v925, %v924
      %v992 = vpack.c.bf16 %v941, %v940
      %v993 = vpack.c.bf16 %v813, %v812
      %v994 = vpack.c.bf16 %v829, %v828
      %v995 = vpack.c.bf16 %v845, %v844
      %v996 = vpack.c.bf16 %v862, %v861
      %v997 = vpack.c.bf16 %v878, %v877
      %v998 = vpack.c.bf16 %v894, %v893
      %v999 = vpack.c.bf16 %v911, %v910
      %v1000 = vpack.c.bf16 %v927, %v926
      %v1001 = vpack.c.bf16 %v943, %v942
      %v1002 = vpack.c.bf16 %v815, %v814
      %v1003 = vpack.c.bf16 %v831, %v830
      %v1004 = vpack.c.bf16 %v847, %v846
      %v1005 = vpack.c.bf16 %v864, %v863
      %v1006 = vpack.c.bf16 %v880, %v879
      %v1007 = vpack.c.bf16 %v896, %v895
      %v1008 = vpack.c.bf16 %v913, %v912
      %v1009 = vpack.c.bf16 %v929, %v928
      %v1010 = vpack.c.bf16 %v945, %v944
      %v1011 = vpack.c.bf16 %v817, %v816
      %v1012 = vpack.c.bf16 %v833, %v832
      %v1013 = vpack.c.bf16 %v849, %v848
      %v1014 = vpack.c.bf16 %v866, %v865
      %v1015 = vpack.c.bf16 %v882, %v881
      %v1016 = vpack.c.bf16 %v898, %v897
      %v1017 = vpack.c.bf16 %v915, %v914
      %v1018 = vpack.c.bf16 %v931, %v930
      %v1019 = vpack.c.bf16 %v947, %v946
      %v1020 = vld [vmem:[%s4] sm:$0xf]
      %v1021 = vld [vmem:[%s4 + $0x4] sm:$0xf]
      %v1022 = vld [vmem:[%s4 + $0x8] sm:$0xf]
      %v1023 = vld [vmem:[%s4 + $0xc] sm:$0xf]
      %v1024 = vld [vmem:[%s4 + $0x10] sm:$0xf]
      %v1025 = vld [vmem:[%s4 + $0x14] sm:$0xf]
      %v1026 = vld [vmem:[%s4 + $0x18] sm:$0xf]
      %v1027 = vld [vmem:[%s4 + $0x1c] sm:$0xf]
      %v1028 = vld [vmem:[%s4 + $0x20] sm:$0xf]
      %v1029 = vld [vmem:[%s4 + $0x24] sm:$0xf]
      %v1030 = vld [vmem:[%s4 + $0x28] sm:$0xf]
      %v1031 = vld [vmem:[%s4 + $0x2c] sm:$0xf]
      %v1032 = vld [vmem:[%s4 + $0x30] sm:$0xf]
      %v1033 = vld [vmem:[%s4 + $0x34] sm:$0xf]
      %v1034 = vld [vmem:[%s4 + $0x38] sm:$0xf]
      %v1035 = vld [vmem:[%s4 + $0x3c] sm:$0xf]
      %v1036 = vld [vmem:[%s4 + $0x40] sm:$0xf]
      %v1037 = vld [vmem:[%s4 + $0x44] sm:$0xf]
      %v1038 = vld [vmem:[%s4 + $0x48] sm:$0xf]
      %v1039 = vld [vmem:[%s4 + $0x4c] sm:$0xf]
      %v1040 = vld [vmem:[%s4 + $0x50] sm:$0xf]
      %v1041 = vld [vmem:[%s4 + $0x54] sm:$0xf]
      %v1042 = vld [vmem:[%s4 + $0x58] sm:$0xf]
      %v1043 = vld [vmem:[%s4 + $0x5c] sm:$0xf]
      %v1044 = vld [vmem:[%s4 + $0x60] sm:$0xf]
      %v1045 = vld [vmem:[%s4 + $0x64] sm:$0xf]
      %v1046 = vld [vmem:[%s4 + $0x68] sm:$0xf]
      %v1047 = vld [vmem:[%s4 + $0x6c] sm:$0xf]
      %v1048 = vld [vmem:[%s4 + $0x70] sm:$0xf]
      %v1049 = vld [vmem:[%s4 + $0x74] sm:$0xf]
      %v1050 = vld [vmem:[%s4 + $0x78] sm:$0xf]
      %v1051 = vld [vmem:[%s4 + $0x7c] sm:$0xf]
      %v1052 = vld [vmem:[%s4 + $0x80] sm:$0xf]
      %v1053 = vld [vmem:[%s4 + $0x84] sm:$0xf]
      %v1054 = vld [vmem:[%s4 + $0x88] sm:$0xf]
      %v1055 = vld [vmem:[%s4 + $0x8c] sm:$0xf]
      %v1056 = vld [vmem:[%s4 + $0x90] sm:$0xf]
      %v1057 = vld [vmem:[%s4 + $0x94] sm:$0xf]
      %v1058 = vld [vmem:[%s4 + $0x98] sm:$0xf]
      %v1059 = vld [vmem:[%s4 + $0x9c] sm:$0xf]
      %v1060 = vld [vmem:[%s4 + $0xa0] sm:$0xf]
      %v1061 = vld [vmem:[%s4 + $0xa4] sm:$0xf]
      %v1062 = vld [vmem:[%s4 + $0xa8] sm:$0xf]
      %v1063 = vld [vmem:[%s4 + $0xac] sm:$0xf]
      %v1064 = vld [vmem:[%s4 + $0xb0] sm:$0xf]
      %v1065 = vld [vmem:[%s4 + $0xb4] sm:$0xf]
      %v1066 = vld [vmem:[%s4 + $0xb8] sm:$0xf]
      %v1067 = vld [vmem:[%s4 + $0xbc] sm:$0xf]
      %v1068 = vld [vmem:[%s4 + $0xc0] sm:$0xf]
      %v1069 = vld [vmem:[%s4 + $0xc4] sm:$0xf]
      %v1070 = vld [vmem:[%s4 + $0xc8] sm:$0xf]
      %v1071 = vld [vmem:[%s4 + $0xcc] sm:$0xf]
      %v1072 = vld [vmem:[%s4 + $0xd0] sm:$0xf]
      %v1073 = vld [vmem:[%s4 + $0xd4] sm:$0xf]
      %v1074 = vld [vmem:[%s4 + $0xd8] sm:$0xf]
      %v1075 = vld [vmem:[%s4 + $0xdc] sm:$0xf]
      %v1076 = vld [vmem:[%s4 + $0xe0] sm:$0xf]
      %v1077 = vld [vmem:[%s4 + $0xe4] sm:$0xf]
      %v1078 = vld [vmem:[%s4 + $0xe8] sm:$0xf]
      %v1079 = vld [vmem:[%s4 + $0xec] sm:$0xf]
      %v1080 = vld [vmem:[%s4 + $0xf0] sm:$0xf]
      %v1081 = vld [vmem:[%s4 + $0xf4] sm:$0xf]
      %v1082 = vld [vmem:[%s4 + $0xf8] sm:$0xf]
      %v1083 = vld [vmem:[%s4 + $0xfc] sm:$0xf]
      %v1084 = vld [vmem:[%s4 + $0x100] sm:$0xf]
      %v1085 = vld [vmem:[%s4 + $0x104] sm:$0xf]
      %v1086 = vld [vmem:[%s4 + $0x108] sm:$0xf]
      %v1087 = vld [vmem:[%s4 + $0x10c] sm:$0xf]
      %v1088 = vld [vmem:[%s4 + $0x110] sm:$0xf]
      %v1089 = vld [vmem:[%s4 + $0x114] sm:$0xf]
      %v1090 = vld [vmem:[%s4 + $0x118] sm:$0xf]
      %v1091 = vld [vmem:[%s4 + $0x11c] sm:$0xf]
      %v1092 = vld [vmem:[%s4 + $0x120] sm:$0xf]
      %v1093 = vld [vmem:[%s4 + $0x124] sm:$0xf]
      %v1094 = vld [vmem:[%s4 + $0x128] sm:$0xf]
      %v1095 = vld [vmem:[%s4 + $0x12c] sm:$0xf]
      %v1096 = vld [vmem:[%s4 + $0x130] sm:$0xf]
      %v1097 = vld [vmem:[%s4 + $0x134] sm:$0xf]
      %v1098 = vld [vmem:[%s4 + $0x138] sm:$0xf]
      %v1099 = vld [vmem:[%s4 + $0x13c] sm:$0xf]
      %v1100 = vld [vmem:[%s4 + $0x140] sm:$0xf]
      %v1101 = vld [vmem:[%s4 + $0x144] sm:$0xf]
      %v1102 = vld [vmem:[%s4 + $0x148] sm:$0xf]
      %v1103 = vld [vmem:[%s4 + $0x14c] sm:$0xf]
      %v1104 = vld [vmem:[%s4 + $0x150] sm:$0xf]
      %v1105 = vld [vmem:[%s4 + $0x154] sm:$0xf]
      %v1106 = vld [vmem:[%s4 + $0x158] sm:$0xf]
      %v1107 = vld [vmem:[%s4 + $0x15c] sm:$0xf]
      %v1108 = vld [vmem:[%s4 + $0x160] sm:$0xf]
      %v1109 = vld [vmem:[%s4 + $0x164] sm:$0xf]
      %v1110 = vld [vmem:[%s4 + $0x168] sm:$0xf]
      %v1111 = vld [vmem:[%s4 + $0x16c] sm:$0xf]
      %v1112 = vld [vmem:[%s4 + $0x170] sm:$0xf]
      %v1113 = vld [vmem:[%s4 + $0x174] sm:$0xf]
      %v1114 = vld [vmem:[%s4 + $0x178] sm:$0xf]
      %v1115 = vld [vmem:[%s4 + $0x17c] sm:$0xf]
      %v1116 = vld [vmem:[%s4 + $0x180] sm:$0xf]
      %v1117 = vld [vmem:[%s4 + $0x184] sm:$0xf]
      %v1118 = vld [vmem:[%s4 + $0x188] sm:$0xf]
      %v1119 = vld [vmem:[%s4 + $0x18c] sm:$0xf]
      %v1120 = vld [vmem:[%s4 + $0x190] sm:$0xf]
      %v1121 = vld [vmem:[%s4 + $0x194] sm:$0xf]
      %v1122 = vld [vmem:[%s4 + $0x198] sm:$0xf]
      %v1123 = vld [vmem:[%s4 + $0x19c] sm:$0xf]
      %v1124 = vld [vmem:[%s4 + $0x1a0] sm:$0xf]
      %v1125 = vld [vmem:[%s4 + $0x1a4] sm:$0xf]
      %v1126 = vld [vmem:[%s4 + $0x1a8] sm:$0xf]
      %v1127 = vld [vmem:[%s4 + $0x1ac] sm:$0xf]
      %v1128 = vld [vmem:[%s4 + $0x1b0] sm:$0xf]
      %v1129 = vld [vmem:[%s4 + $0x1b4] sm:$0xf]
      %v1130 = vld [vmem:[%s4 + $0x1b8] sm:$0xf]
      %v1131 = vld [vmem:[%s4 + $0x1bc] sm:$0xf]
      %v1132 = vld [vmem:[%s4 + $0x1c0] sm:$0xf]
      %v1133 = vld [vmem:[%s4 + $0x1c4] sm:$0xf]
      %v1134 = vld [vmem:[%s4 + $0x1c8] sm:$0xf]
      %v1135 = vld [vmem:[%s4 + $0x1cc] sm:$0xf]
      %v1136 = vld [vmem:[%s4 + $0x1d0] sm:$0xf]
      %v1137 = vld [vmem:[%s4 + $0x1d4] sm:$0xf]
      %v1138 = vld [vmem:[%s4 + $0x1d8] sm:$0xf]
      %v1139 = vld [vmem:[%s4 + $0x1dc] sm:$0xf]
      %v1140 = vld [vmem:[%s4 + $0x1e0] sm:$0xf]
      %v1141 = vld [vmem:[%s4 + $0x1e4] sm:$0xf]
      %v1142 = vld [vmem:[%s4 + $0x1e8] sm:$0xf]
      %v1143 = vld [vmem:[%s4 + $0x1ec] sm:$0xf]
      %v1144 = vld [vmem:[%s4 + $0x1f0] sm:$0xf]
      %v1145 = vld [vmem:[%s4 + $0x1f4] sm:$0xf]
      %v1146 = vld [vmem:[%s4 + $0x1f8] sm:$0xf]
      %v1147 = vld [vmem:[%s4 + $0x1fc] sm:$0xf]
      %v1148 = vld [vmem:[%s4 + $0x200] sm:$0xf]
      %v1149 = vld [vmem:[%s4 + $0x204] sm:$0xf]
      %v1150 = vld [vmem:[%s4 + $0x208] sm:$0xf]
      %v1151 = vld [vmem:[%s4 + $0x20c] sm:$0xf]
      %v1152 = vld [vmem:[%s4 + $0x210] sm:$0xf]
      %v1153 = vld [vmem:[%s4 + $0x214] sm:$0xf]
      %v1154 = vld [vmem:[%s4 + $0x218] sm:$0xf]
      %v1155 = vld [vmem:[%s4 + $0x21c] sm:$0xf]
      %v1156 = vld [vmem:[%s4 + $0x220] sm:$0xf]
      %v1157 = vld [vmem:[%s4 + $0x224] sm:$0xf]
      %v1158 = vld [vmem:[%s4 + $0x228] sm:$0xf]
      %v1159 = vld [vmem:[%s4 + $0x22c] sm:$0xf]
      %v1160 = vld [vmem:[%s4 + $0x230] sm:$0xf]
      %v1161 = vld [vmem:[%s4 + $0x234] sm:$0xf]
      %v1162 = vld [vmem:[%s4 + $0x238] sm:$0xf]
      %v1163 = vld [vmem:[%s4 + $0x23c] sm:$0xf]
      %v1308 = vunpack.c.l.b16 %v1020
      %v1309 = vunpack.c.l.b16 %v1021
      %v1310 = vunpack.c.l.b16 %v1022
      %v1311 = vunpack.c.l.b16 %v1023
      %v1312 = vunpack.c.l.b16 %v1024
      %v1313 = vunpack.c.l.b16 %v1025
      %v1314 = vunpack.c.l.b16 %v1026
      %v1315 = vunpack.c.l.b16 %v1027
      %v1316 = vunpack.c.l.b16 %v1028
      %v1317 = vunpack.c.l.b16 %v1029
      %v1318 = vunpack.c.l.b16 %v1030
      %v1319 = vunpack.c.l.b16 %v1031
      %v1320 = vunpack.c.l.b16 %v1032
      %v1321 = vunpack.c.l.b16 %v1033
      %v1322 = vunpack.c.l.b16 %v1034
      %v1323 = vunpack.c.l.b16 %v1035
      %v1324 = vunpack.c.l.b16 %v1036
      %v1325 = vunpack.c.l.b16 %v1037
      %v1326 = vunpack.c.l.b16 %v1038
      %v1327 = vunpack.c.l.b16 %v1039
      %v1328 = vunpack.c.l.b16 %v1040
      %v1329 = vunpack.c.l.b16 %v1041
      %v1330 = vunpack.c.l.b16 %v1042
      %v1331 = vunpack.c.l.b16 %v1043
      %v1332 = vunpack.c.l.b16 %v1044
      %v1333 = vunpack.c.l.b16 %v1045
      %v1334 = vunpack.c.l.b16 %v1046
      %v1335 = vunpack.c.l.b16 %v1047
      %v1336 = vunpack.c.l.b16 %v1048
      %v1337 = vunpack.c.l.b16 %v1049
      %v1338 = vunpack.c.l.b16 %v1050
      %v1339 = vunpack.c.l.b16 %v1051
      %v1340 = vunpack.c.l.b16 %v1052
      %v1341 = vunpack.c.l.b16 %v1053
      %v1342 = vunpack.c.l.b16 %v1054
      %v1343 = vunpack.c.l.b16 %v1055
      %v1344 = vunpack.c.l.b16 %v1056
      %v1345 = vunpack.c.l.b16 %v1057
      %v1346 = vunpack.c.l.b16 %v1058
      %v1347 = vunpack.c.l.b16 %v1059
      %v1348 = vunpack.c.l.b16 %v1060
      %v1349 = vunpack.c.l.b16 %v1061
      %v1350 = vunpack.c.l.b16 %v1062
      %v1351 = vunpack.c.l.b16 %v1063
      %v1352 = vunpack.c.l.b16 %v1064
      %v1353 = vunpack.c.l.b16 %v1065
      %v1354 = vunpack.c.l.b16 %v1066
      %v1355 = vunpack.c.l.b16 %v1067
      %v1356 = vunpack.c.l.b16 %v1068
      %v1357 = vunpack.c.l.b16 %v1069
      %v1358 = vunpack.c.l.b16 %v1070
      %v1359 = vunpack.c.l.b16 %v1071
      %v1360 = vunpack.c.l.b16 %v1072
      %v1361 = vunpack.c.l.b16 %v1073
      %v1362 = vunpack.c.l.b16 %v1074
      %v1363 = vunpack.c.l.b16 %v1075
      %v1364 = vunpack.c.l.b16 %v1076
      %v1365 = vunpack.c.l.b16 %v1077
      %v1366 = vunpack.c.l.b16 %v1078
      %v1367 = vunpack.c.l.b16 %v1079
      %v1368 = vunpack.c.l.b16 %v1080
      %v1369 = vunpack.c.l.b16 %v1081
      %v1370 = vunpack.c.l.b16 %v1082
      %v1371 = vunpack.c.l.b16 %v1083
      %v1372 = vunpack.c.l.b16 %v1084
      %v1373 = vunpack.c.l.b16 %v1085
      %v1374 = vunpack.c.l.b16 %v1086
      %v1375 = vunpack.c.l.b16 %v1087
      %v1376 = vunpack.c.l.b16 %v1088
      %v1377 = vunpack.c.l.b16 %v1089
      %v1378 = vunpack.c.l.b16 %v1090
      %v1379 = vunpack.c.l.b16 %v1091
      %v1380 = vunpack.c.l.b16 %v1092
      %v1381 = vunpack.c.l.b16 %v1093
      %v1382 = vunpack.c.l.b16 %v1094
      %v1383 = vunpack.c.l.b16 %v1095
      %v1384 = vunpack.c.l.b16 %v1096
      %v1385 = vunpack.c.l.b16 %v1097
      %v1386 = vunpack.c.l.b16 %v1098
      %v1387 = vunpack.c.l.b16 %v1099
      %v1388 = vunpack.c.l.b16 %v1100
      %v1389 = vunpack.c.l.b16 %v1101
      %v1390 = vunpack.c.l.b16 %v1102
      %v1391 = vunpack.c.l.b16 %v1103
      %v1392 = vunpack.c.l.b16 %v1104
      %v1393 = vunpack.c.l.b16 %v1105
      %v1394 = vunpack.c.l.b16 %v1106
      %v1395 = vunpack.c.l.b16 %v1107
      %v1396 = vunpack.c.l.b16 %v1108
      %v1397 = vunpack.c.l.b16 %v1109
      %v1398 = vunpack.c.l.b16 %v1110
      %v1399 = vunpack.c.l.b16 %v1111
      %v1400 = vunpack.c.l.b16 %v1112
      %v1401 = vunpack.c.l.b16 %v1113
      %v1402 = vunpack.c.l.b16 %v1114
      %v1403 = vunpack.c.l.b16 %v1115
      %v1404 = vunpack.c.l.b16 %v1116
      %v1405 = vunpack.c.l.b16 %v1117
      %v1406 = vunpack.c.l.b16 %v1118
      %v1407 = vunpack.c.l.b16 %v1119
      %v1408 = vunpack.c.l.b16 %v1120
      %v1409 = vunpack.c.l.b16 %v1121
      %v1410 = vunpack.c.l.b16 %v1122
      %v1411 = vunpack.c.l.b16 %v1123
      %v1412 = vunpack.c.l.b16 %v1124
      %v1413 = vunpack.c.l.b16 %v1125
      %v1414 = vunpack.c.l.b16 %v1126
      %v1415 = vunpack.c.l.b16 %v1127
      %v1416 = vunpack.c.l.b16 %v1128
      %v1417 = vunpack.c.l.b16 %v1129
      %v1418 = vunpack.c.l.b16 %v1130
      %v1419 = vunpack.c.l.b16 %v1131
      %v1420 = vunpack.c.l.b16 %v1132
      %v1421 = vunpack.c.l.b16 %v1133
      %v1422 = vunpack.c.l.b16 %v1134
      %v1423 = vunpack.c.l.b16 %v1135
      %v1424 = vunpack.c.l.b16 %v1136
      %v1425 = vunpack.c.l.b16 %v1137
      %v1426 = vunpack.c.l.b16 %v1138
      %v1427 = vunpack.c.l.b16 %v1139
      %v1428 = vunpack.c.l.b16 %v1140
      %v1429 = vunpack.c.l.b16 %v1141
      %v1430 = vunpack.c.l.b16 %v1142
      %v1431 = vunpack.c.l.b16 %v1143
      %v1432 = vunpack.c.l.b16 %v1144
      %v1433 = vunpack.c.l.b16 %v1145
      %v1434 = vunpack.c.l.b16 %v1146
      %v1435 = vunpack.c.l.b16 %v1147
      %v1436 = vunpack.c.l.b16 %v1148
      %v1437 = vunpack.c.l.b16 %v1149
      %v1438 = vunpack.c.l.b16 %v1150
      %v1439 = vunpack.c.l.b16 %v1151
      %v1440 = vunpack.c.l.b16 %v1152
      %v1441 = vunpack.c.l.b16 %v1153
      %v1442 = vunpack.c.l.b16 %v1154
      %v1443 = vunpack.c.l.b16 %v1155
      %v1444 = vunpack.c.l.b16 %v1156
      %v1445 = vunpack.c.l.b16 %v1157
      %v1446 = vunpack.c.l.b16 %v1158
      %v1447 = vunpack.c.l.b16 %v1159
      %v1448 = vunpack.c.l.b16 %v1160
      %v1449 = vunpack.c.l.b16 %v1161
      %v1450 = vunpack.c.l.b16 %v1162
      %v1451 = vunpack.c.l.b16 %v1163
      %v1452 = vpack.c.b16 %v1309, %v1308
      %v1453 = vpack.c.b16 %v1311, %v1310
      %v1454 = vpack.c.b16 %v1313, %v1312
      %v1455 = vpack.c.b16 %v1315, %v1314
      %v1456 = vpack.c.b16 %v1317, %v1316
      %v1457 = vpack.c.b16 %v1319, %v1318
      %v1458 = vpack.c.b16 %v1321, %v1320
      %v1459 = vpack.c.b16 %v1323, %v1322
      %v1460 = vpack.c.b16 %v1325, %v1324
      %v1461 = vpack.c.b16 %v1327, %v1326
      %v1462 = vpack.c.b16 %v1329, %v1328
      %v1463 = vpack.c.b16 %v1331, %v1330
      %v1464 = vpack.c.b16 %v1333, %v1332
      %v1465 = vpack.c.b16 %v1335, %v1334
      %v1466 = vpack.c.b16 %v1337, %v1336
      %v1467 = vpack.c.b16 %v1339, %v1338
      %v1468 = vpack.c.b16 %v1341, %v1340
      %v1469 = vpack.c.b16 %v1343, %v1342
      %v1470 = vpack.c.b16 %v1345, %v1344
      %v1471 = vpack.c.b16 %v1347, %v1346
      %v1472 = vpack.c.b16 %v1349, %v1348
      %v1473 = vpack.c.b16 %v1351, %v1350
      %v1474 = vpack.c.b16 %v1353, %v1352
      %v1475 = vpack.c.b16 %v1355, %v1354
      %v1476 = vpack.c.b16 %v1357, %v1356
      %v1477 = vpack.c.b16 %v1359, %v1358
      %v1478 = vpack.c.b16 %v1361, %v1360
      %v1479 = vpack.c.b16 %v1363, %v1362
      %v1480 = vpack.c.b16 %v1365, %v1364
      %v1481 = vpack.c.b16 %v1367, %v1366
      %v1482 = vpack.c.b16 %v1369, %v1368
      %v1483 = vpack.c.b16 %v1371, %v1370
      %v1484 = vpack.c.b16 %v1373, %v1372
      %v1485 = vpack.c.b16 %v1375, %v1374
      %v1486 = vpack.c.b16 %v1377, %v1376
      %v1487 = vpack.c.b16 %v1379, %v1378
      %v1488 = vpack.c.b16 %v1381, %v1380
      %v1489 = vpack.c.b16 %v1383, %v1382
      %v1490 = vpack.c.b16 %v1385, %v1384
      %v1491 = vpack.c.b16 %v1387, %v1386
      %v1492 = vpack.c.b16 %v1389, %v1388
      %v1493 = vpack.c.b16 %v1391, %v1390
      %v1494 = vpack.c.b16 %v1393, %v1392
      %v1495 = vpack.c.b16 %v1395, %v1394
      %v1496 = vpack.c.b16 %v1397, %v1396
      %v1497 = vpack.c.b16 %v1399, %v1398
      %v1498 = vpack.c.b16 %v1401, %v1400
      %v1499 = vpack.c.b16 %v1403, %v1402
      %v1500 = vpack.c.b16 %v1405, %v1404
      %v1501 = vpack.c.b16 %v1407, %v1406
      %v1502 = vpack.c.b16 %v1409, %v1408
      %v1503 = vpack.c.b16 %v1411, %v1410
      %v1504 = vpack.c.b16 %v1413, %v1412
      %v1505 = vpack.c.b16 %v1415, %v1414
      %v1506 = vpack.c.b16 %v1417, %v1416
      %v1507 = vpack.c.b16 %v1419, %v1418
      %v1508 = vpack.c.b16 %v1421, %v1420
      %v1509 = vpack.c.b16 %v1423, %v1422
      %v1510 = vpack.c.b16 %v1425, %v1424
      %v1511 = vpack.c.b16 %v1427, %v1426
      %v1512 = vpack.c.b16 %v1429, %v1428
      %v1513 = vpack.c.b16 %v1431, %v1430
      %v1514 = vpack.c.b16 %v1433, %v1432
      %v1515 = vpack.c.b16 %v1435, %v1434
      %v1516 = vpack.c.b16 %v1437, %v1436
      %v1517 = vpack.c.b16 %v1439, %v1438
      %v1518 = vpack.c.b16 %v1441, %v1440
      %v1519 = vpack.c.b16 %v1443, %v1442
      %v1520 = vpack.c.b16 %v1445, %v1444
      %v1521 = vpack.c.b16 %v1447, %v1446
      %v1522 = vpack.c.b16 %v1449, %v1448
      %v1523 = vpack.c.b16 %v1451, %v1450
      %1596 = vmatprep.subr.bf16.mxu0 0
      %1597 = vmatpush1.bf16.msra.mxu0 %v1452
      %1598 = vmatprep.subr.bf16.mxu0 0
      %1599 = vmatpush1.bf16.msra.mxu0 %v1453
      %1600 = vmatprep.subr.bf16.mxu0 0
      %1601 = vmatpush1.bf16.msra.mxu0 %v1454
      %1602 = vmatprep.subr.bf16.mxu0 0
      %1603 = vmatpush1.bf16.msra.mxu0 %v1455
      %1604 = vmatprep.subr.bf16.mxu0 0
      %1605 = vmatpush1.bf16.msra.mxu0 %v1456
      %1606 = vmatprep.subr.bf16.mxu0 0
      %1607 = vmatpush1.bf16.msra.mxu0 %v1457
      %1608 = vmatprep.subr.bf16.mxu0 0
      %1609 = vmatpush1.bf16.msra.mxu0 %v1458
      %1610 = vmatprep.subr.bf16.mxu0 0
      %1611 = vmatpush1.bf16.msra.mxu0 %v1459
      %1612 = vmatprep.subr.bf16.mxu0 0
      %1613 = vmatpush1.bf16.msra.mxu0 %v1460
      %1614 = vmatprep.subr.bf16.mxu0 0
      %1615 = vmatpush1.bf16.msra.mxu0 %v1461
      %1616 = vmatprep.subr.bf16.mxu0 0
      %1617 = vmatpush1.bf16.msra.mxu0 %v1462
      %1618 = vmatprep.subr.bf16.mxu0 0
      %1619 = vmatpush1.bf16.msra.mxu0 %v1463
      %1620 = vmatprep.subr.bf16.mxu0 0
      %1621 = vmatpush1.bf16.msra.mxu0 %v1464
      %1622 = vmatprep.subr.bf16.mxu0 0
      %1623 = vmatpush1.bf16.msra.mxu0 %v1465
      %1624 = vmatprep.subr.bf16.mxu0 0
      %1625 = vmatpush1.bf16.msra.mxu0 %v1466
      %1626 = vmatprep.subr.bf16.mxu0 0
      %1627 = vmatpush1.bf16.msra.mxu0 %v1467
      %1628 = vmatprep.mubr.bf16.mxu0 %v949
      %1629 = vmatmul.mubr.bf16.gmra.mrb[0].mxu0 %v948
      %v1630 = vpop.f32.mrb[0].mxu0
      %v1631 = vadd.f32 0.0, %v1630
      %v1632 = vpop.f32.mrb[0].mxu0
      %v1633 = vpop.f32.mrb[0].mxu0
      %v1634 = vadd.f32 0.0, %v1633
      %v1635 = vpop.f32.mrb[0].mxu0
      %1636 = vmatprep.mubr.bf16.mxu0 %v958
      %1637 = vmatmul.mubr.bf16.gmra.mrb[0].mxu0 %v957
      %v1638 = vpop.f32.mrb[0].mxu0
      %v1639 = vadd.f32 0.0, %v1638
      %v1640 = vpop.f32.mrb[0].mxu0
      %v1641 = vpop.f32.mrb[0].mxu0
      %v1642 = vadd.f32 0.0, %v1641
      %v1643 = vpop.f32.mrb[0].mxu0
      %1644 = vmatprep.mubr.bf16.mxu0 %v967
      %1645 = vmatmul.mubr.bf16.gmra.mrb[0].mxu0 %v966
      %v1646 = vpop.f32.mrb[0].mxu0
      %v1647 = vadd.f32 0.0, %v1646
      %v1648 = vpop.f32.mrb[0].mxu0
      %v1649 = vpop.f32.mrb[0].mxu0
      %v1650 = vadd.f32 0.0, %v1649
      %v1651 = vpop.f32.mrb[0].mxu0
      %1652 = vmatprep.mubr.bf16.mxu0 %v976
      %1653 = vmatmul.mubr.bf16.gmra.mrb[0].mxu0 %v975
      %v1654 = vpop.f32.mrb[0].mxu0
      %v1655 = vadd.f32 0.0, %v1654
      %v1656 = vpop.f32.mrb[0].mxu0
      %v1657 = vpop.f32.mrb[0].mxu0
      %v1658 = vadd.f32 0.0, %v1657
      %v1659 = vpop.f32.mrb[0].mxu0
      %1660 = vmatprep.mubr.bf16.mxu0 %v985
      %1661 = vmatmul.mubr.bf16.gmra.mrb[0].mxu0 %v984
      %v1662 = vpop.f32.mrb[0].mxu0
      %v1663 = vadd.f32 0.0, %v1662
      %v1664 = vpop.f32.mrb[0].mxu0
      %v1665 = vpop.f32.mrb[0].mxu0
      %v1666 = vadd.f32 0.0, %v1665
      %v1667 = vpop.f32.mrb[0].mxu0
      %1668 = vmatprep.mubr.bf16.mxu0 %v994
      %1669 = vmatmul.mubr.bf16.gmra.mrb[0].mxu0 %v993
      %v1670 = vpop.f32.mrb[0].mxu0
      %v1671 = vadd.f32 0.0, %v1670
      %v1672 = vpop.f32.mrb[0].mxu0
      %v1673 = vpop.f32.mrb[0].mxu0
      %v1674 = vadd.f32 0.0, %v1673
      %v1675 = vpop.f32.mrb[0].mxu0
      %1676 = vmatprep.mubr.bf16.mxu0 %v1003
      %1677 = vmatmul.mubr.bf16.gmra.mrb[0].mxu0 %v1002
      %v1678 = vpop.f32.mrb[0].mxu0
      %v1679 = vadd.f32 0.0, %v1678
      %v1680 = vpop.f32.mrb[0].mxu0
      %v1681 = vpop.f32.mrb[0].mxu0
      %v1682 = vadd.f32 0.0, %v1681
      %v1683 = vpop.f32.mrb[0].mxu0
      %1684 = vmatprep.mubr.bf16.mxu0 %v1012
      %1685 = vmatmul.mubr.bf16.gmra.mrb[0].mxu0 %v1011
      %v1686 = vpop.f32.mrb[0].mxu0
      %v1687 = vadd.f32 0.0, %v1686
      %v1688 = vpop.f32.mrb[0].mxu0
      %v1689 = vpop.f32.mrb[0].mxu0
      %v1690 = vadd.f32 0.0, %v1689
      %v1691 = vpop.f32.mrb[0].mxu0
      %1692 = vdwg.mxu0
      %1693 = vmatprep.subr.bf16.mxu0 0
      %1694 = vmatpush1.bf16.msra.mxu0 %v1468
      %1695 = vmatprep.subr.bf16.mxu0 0
      %1696 = vmatpush1.bf16.msra.mxu0 %v1469
      %1697 = vmatprep.subr.bf16.mxu0 0
      %1698 = vmatpush1.bf16.msra.mxu0 %v1470
      %1699 = vmatprep.subr.bf16.mxu0 0
      %1700 = vmatpush1.bf16.msra.mxu0 %v1471
      %1701 = vmatprep.subr.bf16.mxu0 0
      %1702 = vmatpush1.bf16.msra.mxu0 %v1472
      %1703 = vmatprep.subr.bf16.mxu0 0
      %1704 = vmatpush1.bf16.msra.mxu0 %v1473
      %1705 = vmatprep.subr.bf16.mxu0 0
      %1706 = vmatpush1.bf16.msra.mxu0 %v1474
      %1707 = vmatprep.subr.bf16.mxu0 0
      %1708 = vmatpush1.bf16.msra.mxu0 %v1475
      %1709 = vmatprep.subr.bf16.mxu0 0
      %1710 = vmatpush1.bf16.msra.mxu0 %v1476
      %1711 = vmatprep.subr.bf16.mxu0 0
      %1712 = vmatpush1.bf16.msra.mxu0 %v1477
      %1713 = vmatprep.subr.bf16.mxu0 0
      %1714 = vmatpush1.bf16.msra.mxu0 %v1478
      %1715 = vmatprep.subr.bf16.mxu0 0
      %1716 = vmatpush1.bf16.msra.mxu0 %v1479
      %1717 = vmatprep.subr.bf16.mxu0 0
      %1718 = vmatpush1.bf16.msra.mxu0 %v1480
      %1719 = vmatprep.subr.bf16.mxu0 0
      %1720 = vmatpush1.bf16.msra.mxu0 %v1481
      %1721 = vmatprep.subr.bf16.mxu0 0
      %1722 = vmatpush1.bf16.msra.mxu0 %v1482
      %1723 = vmatprep.subr.bf16.mxu0 0
      %1724 = vmatpush1.bf16.msra.mxu0 %v1483
      %1725 = vmatprep.mubr.bf16.mxu0 %v951
      %1726 = vmatmul.mubr.bf16.gmra.mrb[0].mxu0 %v950
      %v1727 = vpop.f32.mrb[0].mxu0
      %v1728 = vadd.f32 %v1631, %v1727
      %v1729 = vpop.f32.mrb[0].mxu0
      %v1730 = vpop.f32.mrb[0].mxu0
      %v1731 = vadd.f32 %v1634, %v1730
      %v1732 = vpop.f32.mrb[0].mxu0
      %1733 = vmatprep.mubr.bf16.mxu0 %v960
      %1734 = vmatmul.mubr.bf16.gmra.mrb[0].mxu0 %v959
      %v1735 = vpop.f32.mrb[0].mxu0
      %v1736 = vadd.f32 %v1639, %v1735
      %v1737 = vpop.f32.mrb[0].mxu0
      %v1738 = vpop.f32.mrb[0].mxu0
      %v1739 = vadd.f32 %v1642, %v1738
      %v1740 = vpop.f32.mrb[0].mxu0
      %1741 = vmatprep.mubr.bf16.mxu0 %v969
      %1742 = vmatmul.mubr.bf16.gmra.mrb[0].mxu0 %v968
      %v1743 = vpop.f32.mrb[0].mxu0
      %v1744 = vadd.f32 %v1647, %v1743
      %v1745 = vpop.f32.mrb[0].mxu0
      %v1746 = vpop.f32.mrb[0].mxu0
      %v1747 = vadd.f32 %v1650, %v1746
      %v1748 = vpop.f32.mrb[0].mxu0
      %1749 = vmatprep.mubr.bf16.mxu0 %v978
      %1750 = vmatmul.mubr.bf16.gmra.mrb[0].mxu0 %v977
      %v1751 = vpop.f32.mrb[0].mxu0
      %v1752 = vadd.f32 %v1655, %v1751
      %v1753 = vpop.f32.mrb[0].mxu0
      %v1754 = vpop.f32.mrb[0].mxu0
      %v1755 = vadd.f32 %v1658, %v1754
      %v1756 = vpop.f32.mrb[0].mxu0
      %1757 = vmatprep.mubr.bf16.mxu0 %v987
      %1758 = vmatmul.mubr.bf16.gmra.mrb[0].mxu0 %v986
      %v1759 = vpop.f32.mrb[0].mxu0
      %v1760 = vadd.f32 %v1663, %v1759
      %v1761 = vpop.f32.mrb[0].mxu0
      %v1762 = vpop.f32.mrb[0].mxu0
      %v1763 = vadd.f32 %v1666, %v1762
      %v1764 = vpop.f32.mrb[0].mxu0
      %1765 = vmatprep.mubr.bf16.mxu0 %v996
      %1766 = vmatmul.mubr.bf16.gmra.mrb[0].mxu0 %v995
      %v1767 = vpop.f32.mrb[0].mxu0
      %v1768 = vadd.f32 %v1671, %v1767
      %v1769 = vpop.f32.mrb[0].mxu0
      %v1770 = vpop.f32.mrb[0].mxu0
      %v1771 = vadd.f32 %v1674, %v1770
      %v1772 = vpop.f32.mrb[0].mxu0
      %1773 = vmatprep.mubr.bf16.mxu0 %v1005
      %1774 = vmatmul.mubr.bf16.gmra.mrb[0].mxu0 %v1004
      %v1775 = vpop.f32.mrb[0].mxu0
      %v1776 = vadd.f32 %v1679, %v1775
      %v1777 = vpop.f32.mrb[0].mxu0
      %v1778 = vpop.f32.mrb[0].mxu0
      %v1779 = vadd.f32 %v1682, %v1778
      %v1780 = vpop.f32.mrb[0].mxu0
      %1781 = vmatprep.mubr.bf16.mxu0 %v1014
      %1782 = vmatmul.mubr.bf16.gmra.mrb[0].mxu0 %v1013
      %v1783 = vpop.f32.mrb[0].mxu0
      %v1784 = vadd.f32 %v1687, %v1783
      %v1785 = vpop.f32.mrb[0].mxu0
      %v1786 = vpop.f32.mrb[0].mxu0
      %v1787 = vadd.f32 %v1690, %v1786
      %v1788 = vpop.f32.mrb[0].mxu0
      %1789 = vdwg.mxu0
      %1790 = vmatprep.subr.bf16.mxu0 0
      %1791 = vmatpush1.bf16.msra.mxu0 %v1484
      %1792 = vmatprep.subr.bf16.mxu0 0
      %1793 = vmatpush1.bf16.msra.mxu0 %v1485
      %1794 = vmatprep.subr.bf16.mxu0 0
      %1795 = vmatpush1.bf16.msra.mxu0 %v1486
      %1796 = vmatprep.subr.bf16.mxu0 0
      %1797 = vmatpush1.bf16.msra.mxu0 %v1487
      %1798 = vmatprep.subr.bf16.mxu0 0
      %1799 = vmatpush1.bf16.msra.mxu0 %v1488
      %1800 = vmatprep.subr.bf16.mxu0 0
      %1801 = vmatpush1.bf16.msra.mxu0 %v1489
      %1802 = vmatprep.subr.bf16.mxu0 0
      %1803 = vmatpush1.bf16.msra.mxu0 %v1490
      %1804 = vmatprep.subr.bf16.mxu0 0
      %1805 = vmatpush1.bf16.msra.mxu0 %v1491
      %1806 = vmatprep.subr.bf16.mxu0 0
      %1807 = vmatpush1.bf16.msra.mxu0 %v1492
      %1808 = vmatprep.subr.bf16.mxu0 0
      %1809 = vmatpush1.bf16.msra.mxu0 %v1493
      %1810 = vmatprep.subr.bf16.mxu0 0
      %1811 = vmatpush1.bf16.msra.mxu0 %v1494
      %1812 = vmatprep.subr.bf16.mxu0 0
      %1813 = vmatpush1.bf16.msra.mxu0 %v1495
      %1814 = vmatprep.subr.bf16.mxu0 0
      %1815 = vmatpush1.bf16.msra.mxu0 %v1496
      %1816 = vmatprep.subr.bf16.mxu0 0
      %1817 = vmatpush1.bf16.msra.mxu0 %v1497
      %1818 = vmatprep.subr.bf16.mxu0 0
      %1819 = vmatpush1.bf16.msra.mxu0 %v1498
      %1820 = vmatprep.subr.bf16.mxu0 0
      %1821 = vmatpush1.bf16.msra.mxu0 %v1499
      %1822 = vmatprep.mubr.bf16.mxu0 %v953
      %1823 = vmatmul.mubr.bf16.gmra.mrb[0].mxu0 %v952
      %v1824 = vpop.f32.mrb[0].mxu0
      %v1825 = vadd.f32 %v1728, %v1824
      %v1826 = vpop.f32.mrb[0].mxu0
      %v1827 = vpop.f32.mrb[0].mxu0
      %v1828 = vadd.f32 %v1731, %v1827
      %v1829 = vpop.f32.mrb[0].mxu0
      %1830 = vmatprep.mubr.bf16.mxu0 %v962
      %1831 = vmatmul.mubr.bf16.gmra.mrb[0].mxu0 %v961
      %v1832 = vpop.f32.mrb[0].mxu0
      %v1833 = vadd.f32 %v1736, %v1832
      %v1834 = vpop.f32.mrb[0].mxu0
      %v1835 = vpop.f32.mrb[0].mxu0
      %v1836 = vadd.f32 %v1739, %v1835
      %v1837 = vpop.f32.mrb[0].mxu0
      %1838 = vmatprep.mubr.bf16.mxu0 %v971
      %1839 = vmatmul.mubr.bf16.gmra.mrb[0].mxu0 %v970
      %v1840 = vpop.f32.mrb[0].mxu0
      %v1841 = vadd.f32 %v1744, %v1840
      %v1842 = vpop.f32.mrb[0].mxu0
      %v1843 = vpop.f32.mrb[0].mxu0
      %v1844 = vadd.f32 %v1747, %v1843
      %v1845 = vpop.f32.mrb[0].mxu0
      %1846 = vmatprep.mubr.bf16.mxu0 %v980
      %1847 = vmatmul.mubr.bf16.gmra.mrb[0].mxu0 %v979
      %v1848 = vpop.f32.mrb[0].mxu0
      %v1849 = vadd.f32 %v1752, %v1848
      %v1850 = vpop.f32.mrb[0].mxu0
      %v1851 = vpop.f32.mrb[0].mxu0
      %v1852 = vadd.f32 %v1755, %v1851
      %v1853 = vpop.f32.mrb[0].mxu0
      %1854 = vmatprep.mubr.bf16.mxu0 %v989
      %1855 = vmatmul.mubr.bf16.gmra.mrb[0].mxu0 %v988
      %v1856 = vpop.f32.mrb[0].mxu0
      %v1857 = vadd.f32 %v1760, %v1856
      %v1858 = vpop.f32.mrb[0].mxu0
      %v1859 = vpop.f32.mrb[0].mxu0
      %v1860 = vadd.f32 %v1763, %v1859
      %v1861 = vpop.f32.mrb[0].mxu0
      %1862 = vmatprep.mubr.bf16.mxu0 %v998
      %1863 = vmatmul.mubr.bf16.gmra.mrb[0].mxu0 %v997
      %v1864 = vpop.f32.mrb[0].mxu0
      %v1865 = vadd.f32 %v1768, %v1864
      %v1866 = vpop.f32.mrb[0].mxu0
      %v1867 = vpop.f32.mrb[0].mxu0
      %v1868 = vadd.f32 %v1771, %v1867
      %v1869 = vpop.f32.mrb[0].mxu0
      %1870 = vmatprep.mubr.bf16.mxu0 %v1007
      %1871 = vmatmul.mubr.bf16.gmra.mrb[0].mxu0 %v1006
      %v1872 = vpop.f32.mrb[0].mxu0
      %v1873 = vadd.f32 %v1776, %v1872
      %v1874 = vpop.f32.mrb[0].mxu0
      %v1875 = vpop.f32.mrb[0].mxu0
      %v1876 = vadd.f32 %v1779, %v1875
      %v1877 = vpop.f32.mrb[0].mxu0
      %1878 = vmatprep.mubr.bf16.mxu0 %v1016
      %1879 = vmatmul.mubr.bf16.gmra.mrb[0].mxu0 %v1015
      %v1880 = vpop.f32.mrb[0].mxu0
      %v1881 = vadd.f32 %v1784, %v1880
      %v1882 = vpop.f32.mrb[0].mxu0
      %v1883 = vpop.f32.mrb[0].mxu0
      %v1884 = vadd.f32 %v1787, %v1883
      %v1885 = vpop.f32.mrb[0].mxu0
      %1886 = vdwg.mxu0
      %1887 = vmatprep.subr.bf16.mxu0 0
      %1888 = vmatpush1.bf16.msra.mxu0 %v1500
      %1889 = vmatprep.subr.bf16.mxu0 0
      %1890 = vmatpush1.bf16.msra.mxu0 %v1501
      %1891 = vmatprep.subr.bf16.mxu0 0
      %1892 = vmatpush1.bf16.msra.mxu0 %v1502
      %1893 = vmatprep.subr.bf16.mxu0 0
      %1894 = vmatpush1.bf16.msra.mxu0 %v1503
      %1895 = vmatprep.subr.bf16.mxu0 0
      %1896 = vmatpush1.bf16.msra.mxu0 %v1504
      %1897 = vmatprep.subr.bf16.mxu0 0
      %1898 = vmatpush1.bf16.msra.mxu0 %v1505
      %1899 = vmatprep.subr.bf16.mxu0 0
      %1900 = vmatpush1.bf16.msra.mxu0 %v1506
      %1901 = vmatprep.subr.bf16.mxu0 0
      %1902 = vmatpush1.bf16.msra.mxu0 %v1507
      %1903 = vmatprep.subr.bf16.mxu0 0
      %1904 = vmatpush1.bf16.msra.mxu0 %v1508
      %1905 = vmatprep.subr.bf16.mxu0 0
      %1906 = vmatpush1.bf16.msra.mxu0 %v1509
      %1907 = vmatprep.subr.bf16.mxu0 0
      %1908 = vmatpush1.bf16.msra.mxu0 %v1510
      %1909 = vmatprep.subr.bf16.mxu0 0
      %1910 = vmatpush1.bf16.msra.mxu0 %v1511
      %1911 = vmatprep.subr.bf16.mxu0 0
      %1912 = vmatpush1.bf16.msra.mxu0 %v1512
      %1913 = vmatprep.subr.bf16.mxu0 0
      %1914 = vmatpush1.bf16.msra.mxu0 %v1513
      %1915 = vmatprep.subr.bf16.mxu0 0
      %1916 = vmatpush1.bf16.msra.mxu0 %v1514
      %1917 = vmatprep.subr.bf16.mxu0 0
      %1918 = vmatpush1.bf16.msra.mxu0 %v1515
      %1919 = vmatprep.mubr.bf16.mxu0 %v955
      %1920 = vmatmul.mubr.bf16.gmra.mrb[0].mxu0 %v954
      %v1921 = vpop.f32.mrb[0].mxu0
      %v1922 = vadd.f32 %v1825, %v1921
      %v1923 = vpop.f32.mrb[0].mxu0
      %v1924 = vpop.f32.mrb[0].mxu0
      %v1925 = vadd.f32 %v1828, %v1924
      %v1926 = vpop.f32.mrb[0].mxu0
      %1927 = vmatprep.mubr.bf16.mxu0 %v964
      %1928 = vmatmul.mubr.bf16.gmra.mrb[0].mxu0 %v963
      %v1929 = vpop.f32.mrb[0].mxu0
      %v1930 = vadd.f32 %v1833, %v1929
      %v1931 = vpop.f32.mrb[0].mxu0
      %v1932 = vpop.f32.mrb[0].mxu0
      %v1933 = vadd.f32 %v1836, %v1932
      %v1934 = vpop.f32.mrb[0].mxu0
      %1935 = vmatprep.mubr.bf16.mxu0 %v973
      %1936 = vmatmul.mubr.bf16.gmra.mrb[0].mxu0 %v972
      %v1937 = vpop.f32.mrb[0].mxu0
      %v1938 = vadd.f32 %v1841, %v1937
      %v1939 = vpop.f32.mrb[0].mxu0
      %v1940 = vpop.f32.mrb[0].mxu0
      %v1941 = vadd.f32 %v1844, %v1940
      %v1942 = vpop.f32.mrb[0].mxu0
      %1943 = vmatprep.mubr.bf16.mxu0 %v982
      %1944 = vmatmul.mubr.bf16.gmra.mrb[0].mxu0 %v981
      %v1945 = vpop.f32.mrb[0].mxu0
      %v1946 = vadd.f32 %v1849, %v1945
      %v1947 = vpop.f32.mrb[0].mxu0
      %v1948 = vpop.f32.mrb[0].mxu0
      %v1949 = vadd.f32 %v1852, %v1948
      %v1950 = vpop.f32.mrb[0].mxu0
      %1951 = vmatprep.mubr.bf16.mxu0 %v991
      %1952 = vmatmul.mubr.bf16.gmra.mrb[0].mxu0 %v990
      %v1953 = vpop.f32.mrb[0].mxu0
      %v1954 = vadd.f32 %v1857, %v1953
      %v1955 = vpop.f32.mrb[0].mxu0
      %v1956 = vpop.f32.mrb[0].mxu0
      %v1957 = vadd.f32 %v1860, %v1956
      %v1958 = vpop.f32.mrb[0].mxu0
      %1959 = vmatprep.mubr.bf16.mxu0 %v1000
      %1960 = vmatmul.mubr.bf16.gmra.mrb[0].mxu0 %v999
      %v1961 = vpop.f32.mrb[0].mxu0
      %v1962 = vadd.f32 %v1865, %v1961
      %v1963 = vpop.f32.mrb[0].mxu0
      %v1964 = vpop.f32.mrb[0].mxu0
      %v1965 = vadd.f32 %v1868, %v1964
      %v1966 = vpop.f32.mrb[0].mxu0
      %1967 = vmatprep.mubr.bf16.mxu0 %v1009
      %1968 = vmatmul.mubr.bf16.gmra.mrb[0].mxu0 %v1008
      %v1969 = vpop.f32.mrb[0].mxu0
      %v1970 = vadd.f32 %v1873, %v1969
      %v1971 = vpop.f32.mrb[0].mxu0
      %v1972 = vpop.f32.mrb[0].mxu0
      %v1973 = vadd.f32 %v1876, %v1972
      %v1974 = vpop.f32.mrb[0].mxu0
      %1975 = vmatprep.mubr.bf16.mxu0 %v1018
      %1976 = vmatmul.mubr.bf16.gmra.mrb[0].mxu0 %v1017
      %v1977 = vpop.f32.mrb[0].mxu0
      %v1978 = vadd.f32 %v1881, %v1977
      %v1979 = vpop.f32.mrb[0].mxu0
      %v1980 = vpop.f32.mrb[0].mxu0
      %v1981 = vadd.f32 %v1884, %v1980
      %v1982 = vpop.f32.mrb[0].mxu0
      %1983 = vdwg.mxu0
      %1984 = vmatprep.subr.bf16.mxu0 0
      %1985 = vmatpush1.bf16.msra.mxu0 %v1516
      %1986 = vmatprep.subr.bf16.mxu0 0
      %1987 = vmatpush1.bf16.msra.mxu0 %v1517
      %1988 = vmatprep.subr.bf16.mxu0 0
      %1989 = vmatpush1.bf16.msra.mxu0 %v1518
      %1990 = vmatprep.subr.bf16.mxu0 0
      %1991 = vmatpush1.bf16.msra.mxu0 %v1519
      %1992 = vmatprep.subr.bf16.mxu0 0
      %1993 = vmatpush1.bf16.msra.mxu0 %v1520
      %1994 = vmatprep.subr.bf16.mxu0 0
      %1995 = vmatpush1.bf16.msra.mxu0 %v1521
      %1996 = vmatprep.subr.bf16.mxu0 0
      %1997 = vmatpush1.bf16.msra.mxu0 %v1522
      %1998 = vmatprep.subr.bf16.mxu0 0
      %1999 = vmatpush1.bf16.msra.mxu0 %v1523
      %2000 = vmatprep.subr.bf16.mxu0 0
      %2001 = vmatpush1.bf16.msra.mxu0 0
      %2002 = vmatprep.subr.bf16.mxu0 0
      %2003 = vmatpush1.bf16.msra.mxu0 0
      %2004 = vmatprep.subr.bf16.mxu0 0
      %2005 = vmatpush1.bf16.msra.mxu0 0
      %2006 = vmatprep.subr.bf16.mxu0 0
      %2007 = vmatpush1.bf16.msra.mxu0 0
      %2008 = vmatprep.subr.bf16.mxu0 0
      %2009 = vmatpush1.bf16.msra.mxu0 0
      %2010 = vmatprep.subr.bf16.mxu0 0
      %2011 = vmatpush1.bf16.msra.mxu0 0
      %2012 = vmatprep.subr.bf16.mxu0 0
      %2013 = vmatpush1.bf16.msra.mxu0 0
      %2014 = vmatprep.subr.bf16.mxu0 0
      %2015 = vmatpush1.bf16.msra.mxu0 0
      %2016 = vmatprep.mubr.bf16.mxu0 0
      %2017 = vmatmul.mubr.bf16.gmra.mrb[0].mxu0 %v956
      %v2018 = vpop.f32.mrb[0].mxu0
      %v2019 = vadd.f32 %v1922, %v2018
      %v2020 = vpop.f32.mrb[0].mxu0
      %v2021 = vpop.f32.mrb[0].mxu0
      %v2022 = vadd.f32 %v1925, %v2021
      %v2023 = vpop.f32.mrb[0].mxu0
      %2024 = vmatprep.mubr.bf16.mxu0 0
      %2025 = vmatmul.mubr.bf16.gmra.mrb[0].mxu0 %v965
      %v2026 = vpop.f32.mrb[0].mxu0
      %v2027 = vadd.f32 %v1930, %v2026
      %v2028 = vpop.f32.mrb[0].mxu0
      %v2029 = vpop.f32.mrb[0].mxu0
      %v2030 = vadd.f32 %v1933, %v2029
      %v2031 = vpop.f32.mrb[0].mxu0
      %2032 = vmatprep.mubr.bf16.mxu0 0
      %2033 = vmatmul.mubr.bf16.gmra.mrb[0].mxu0 %v974
      %v2034 = vpop.f32.mrb[0].mxu0
      %v2035 = vadd.f32 %v1938, %v2034
      %v2036 = vpop.f32.mrb[0].mxu0
      %v2037 = vpop.f32.mrb[0].mxu0
      %v2038 = vadd.f32 %v1941, %v2037
      %v2039 = vpop.f32.mrb[0].mxu0
      %2040 = vmatprep.mubr.bf16.mxu0 0
      %2041 = vmatmul.mubr.bf16.gmra.mrb[0].mxu0 %v983
      %v2042 = vpop.f32.mrb[0].mxu0
      %v2043 = vadd.f32 %v1946, %v2042
      %v2044 = vpop.f32.mrb[0].mxu0
      %v2045 = vpop.f32.mrb[0].mxu0
      %v2046 = vadd.f32 %v1949, %v2045
      %v2047 = vpop.f32.mrb[0].mxu0
      %2048 = vmatprep.mubr.bf16.mxu0 0
      %2049 = vmatmul.mubr.bf16.gmra.mrb[0].mxu0 %v992
      %v2050 = vpop.f32.mrb[0].mxu0
      %v2051 = vadd.f32 %v1954, %v2050
      %v2052 = vpop.f32.mrb[0].mxu0
      %v2053 = vpop.f32.mrb[0].mxu0
      %v2054 = vadd.f32 %v1957, %v2053
      %v2055 = vpop.f32.mrb[0].mxu0
      %2056 = vmatprep.mubr.bf16.mxu0 0
      %2057 = vmatmul.mubr.bf16.gmra.mrb[0].mxu0 %v1001
      %v2058 = vpop.f32.mrb[0].mxu0
      %v2059 = vadd.f32 %v1962, %v2058
      %v2060 = vpop.f32.mrb[0].mxu0
      %v2061 = vpop.f32.mrb[0].mxu0
      %v2062 = vadd.f32 %v1965, %v2061
      %v2063 = vpop.f32.mrb[0].mxu0
      %2064 = vmatprep.mubr.bf16.mxu0 0
      %2065 = vmatmul.mubr.bf16.gmra.mrb[0].mxu0 %v1010
      %v2066 = vpop.f32.mrb[0].mxu0
      %v2067 = vadd.f32 %v1970, %v2066
      %v2068 = vpop.f32.mrb[0].mxu0
      %v2069 = vpop.f32.mrb[0].mxu0
      %v2070 = vadd.f32 %v1973, %v2069
      %v2071 = vpop.f32.mrb[0].mxu0
      %2072 = vmatprep.mubr.bf16.mxu0 0
      %2073 = vmatmul.mubr.bf16.gmra.mrb[0].mxu0 %v1019
      %v2074 = vpop.f32.mrb[0].mxu0
      %v2075 = vadd.f32 %v1978, %v2074
      %v2076 = vpop.f32.mrb[0].mxu0
      %v2077 = vpop.f32.mrb[0].mxu0
      %v2078 = vadd.f32 %v1981, %v2077
      %v2079 = vpop.f32.mrb[0].mxu0
      %2080 = vdwg.mxu0
      %v2081 = vld [vmem:[%s5] sm:$0x1]
      %v2083 = vlaneseq
      %v2084 = vshrl.u32 %v2083, 7
      %v2085 = vsub.s32 0, %v2084
      %v2086 = vrot.slane %v2081, %v2085
      %v2088 = vmul.f32 %v2019, %v2086
      %v2089 = vmul.f32 %v2022, %v2086
      %v2090 = vmul.f32 %v2027, %v2086
      %v2091 = vmul.f32 %v2030, %v2086
      %v2092 = vmul.f32 %v2035, %v2086
      %v2093 = vmul.f32 %v2038, %v2086
      %v2094 = vmul.f32 %v2043, %v2086
      %v2095 = vmul.f32 %v2046, %v2086
      %v2096 = vmul.f32 %v2051, %v2086
      %v2097 = vmul.f32 %v2054, %v2086
      %v2098 = vmul.f32 %v2059, %v2086
      %v2099 = vmul.f32 %v2062, %v2086
      %v2100 = vmul.f32 %v2067, %v2086
      %v2101 = vmul.f32 %v2070, %v2086
      %v2102 = vmul.f32 %v2075, %v2086
      %v2103 = vmul.f32 %v2078, %v2086
      %v2104 = vld [vmem:[%s6] sm:$0x1]
      %v2106 = vlaneseq
      %v2107 = vshrl.u32 %v2106, 7
      %v2108 = vsub.s32 0, %v2107
      %v2109 = vrot.slane %v2104, %v2108
      %v2111 = vadd.f32 %v2088, %v2109
      %v2112 = vadd.f32 %v2089, %v2109
      %v2113 = vadd.f32 %v2090, %v2109
      %v2114 = vadd.f32 %v2091, %v2109
      %v2115 = vadd.f32 %v2092, %v2109
      %v2116 = vadd.f32 %v2093, %v2109
      %v2117 = vadd.f32 %v2094, %v2109
      %v2118 = vadd.f32 %v2095, %v2109
      %v2119 = vadd.f32 %v2096, %v2109
      %v2120 = vadd.f32 %v2097, %v2109
      %v2121 = vadd.f32 %v2098, %v2109
      %v2122 = vadd.f32 %v2099, %v2109
      %v2123 = vadd.f32 %v2100, %v2109
      %v2124 = vadd.f32 %v2101, %v2109
      %v2125 = vadd.f32 %v2102, %v2109
      %v2126 = vadd.f32 %v2103, %v2109
      %v2127 = vmax.f32 %v2111, 0.0
      %v2128 = vmax.f32 %v2112, 0.0
      %v2129 = vmax.f32 %v2113, 0.0
      %v2130 = vmax.f32 %v2114, 0.0
      %v2131 = vmax.f32 %v2115, 0.0
      %v2132 = vmax.f32 %v2116, 0.0
      %v2133 = vmax.f32 %v2117, 0.0
      %v2134 = vmax.f32 %v2118, 0.0
      %v2135 = vmax.f32 %v2119, 0.0
      %v2136 = vmax.f32 %v2120, 0.0
      %v2137 = vmax.f32 %v2121, 0.0
      %v2138 = vmax.f32 %v2122, 0.0
      %v2139 = vmax.f32 %v2123, 0.0
      %v2140 = vmax.f32 %v2124, 0.0
      %v2141 = vmax.f32 %v2125, 0.0
      %v2142 = vmax.f32 %v2126, 0.0
      %v2143 = vpack.c.bf16 %v2128, %v2127
      %v2144 = vpack.c.bf16 %v2130, %v2129
      %v2145 = vpack.c.bf16 %v2132, %v2131
      %v2146 = vpack.c.bf16 %v2134, %v2133
      %v2147 = vpack.c.bf16 %v2136, %v2135
      %v2148 = vpack.c.bf16 %v2138, %v2137
      %v2149 = vpack.c.bf16 %v2140, %v2139
      %v2150 = vpack.c.bf16 %v2142, %v2141
      %v2151 = vld [vmem:[%s7] sm:$0xf]
      %v2152 = vld [vmem:[%s7 + $0x4] sm:$0xf]
      %v2153 = vld [vmem:[%s7 + $0x8] sm:$0xf]
      %v2154 = vld [vmem:[%s7 + $0xc] sm:$0xf]
      %v2155 = vld [vmem:[%s7 + $0x10] sm:$0xf]
      %v2156 = vld [vmem:[%s7 + $0x14] sm:$0xf]
      %v2157 = vld [vmem:[%s7 + $0x18] sm:$0xf]
      %v2158 = vld [vmem:[%s7 + $0x1c] sm:$0xf]
      %v2159 = vld [vmem:[%s7 + $0x20] sm:$0xf]
      %v2160 = vld [vmem:[%s7 + $0x24] sm:$0xf]
      %v2161 = vld [vmem:[%s7 + $0x28] sm:$0xf]
      %v2162 = vld [vmem:[%s7 + $0x2c] sm:$0xf]
      %v2163 = vld [vmem:[%s7 + $0x30] sm:$0xf]
      %v2164 = vld [vmem:[%s7 + $0x34] sm:$0xf]
      %v2165 = vld [vmem:[%s7 + $0x38] sm:$0xf]
      %v2166 = vld [vmem:[%s7 + $0x3c] sm:$0xf]
      %v2183 = vunpack.c.l.b16 %v2151
      %v2184 = vunpack.c.l.b16 %v2152
      %v2185 = vunpack.c.l.b16 %v2153
      %v2186 = vunpack.c.l.b16 %v2154
      %v2187 = vunpack.c.l.b16 %v2155
      %v2188 = vunpack.c.l.b16 %v2156
      %v2189 = vunpack.c.l.b16 %v2157
      %v2190 = vunpack.c.l.b16 %v2158
      %v2191 = vunpack.c.l.b16 %v2159
      %v2192 = vunpack.c.l.b16 %v2160
      %v2193 = vunpack.c.l.b16 %v2161
      %v2194 = vunpack.c.l.b16 %v2162
      %v2195 = vunpack.c.l.b16 %v2163
      %v2196 = vunpack.c.l.b16 %v2164
      %v2197 = vunpack.c.l.b16 %v2165
      %v2198 = vunpack.c.l.b16 %v2166
      %v2199 = vpack.c.b16 %v2184, %v2183
      %v2200 = vpack.c.b16 %v2186, %v2185
      %v2201 = vpack.c.b16 %v2188, %v2187
      %v2202 = vpack.c.b16 %v2190, %v2189
      %v2203 = vpack.c.b16 %v2192, %v2191
      %v2204 = vpack.c.b16 %v2194, %v2193
      %v2205 = vpack.c.b16 %v2196, %v2195
      %v2206 = vpack.c.b16 %v2198, %v2197
      %2215 = vmatprep.subr.bf16.mxu0 0
      %2216 = vmatpush1.bf16.msra.mxu0 %v2199
      %2217 = vmatprep.subr.bf16.mxu0 0
      %2218 = vmatpush1.bf16.msra.mxu0 %v2200
      %2219 = vmatprep.subr.bf16.mxu0 0
      %2220 = vmatpush1.bf16.msra.mxu0 %v2201
      %2221 = vmatprep.subr.bf16.mxu0 0
      %2222 = vmatpush1.bf16.msra.mxu0 %v2202
      %2223 = vmatprep.subr.bf16.mxu0 0
      %2224 = vmatpush1.bf16.msra.mxu0 %v2203
      %2225 = vmatprep.subr.bf16.mxu0 0
      %2226 = vmatpush1.bf16.msra.mxu0 %v2204
      %2227 = vmatprep.subr.bf16.mxu0 0
      %2228 = vmatpush1.bf16.msra.mxu0 %v2205
      %2229 = vmatprep.subr.bf16.mxu0 0
      %2230 = vmatpush1.bf16.msra.mxu0 %v2206
      %2231 = vmatprep.subr.bf16.mxu0 0
      %2232 = vmatpush1.bf16.msra.mxu0 0
      %2233 = vmatprep.subr.bf16.mxu0 0
      %2234 = vmatpush1.bf16.msra.mxu0 0
      %2235 = vmatprep.subr.bf16.mxu0 0
      %2236 = vmatpush1.bf16.msra.mxu0 0
      %2237 = vmatprep.subr.bf16.mxu0 0
      %2238 = vmatpush1.bf16.msra.mxu0 0
      %2239 = vmatprep.subr.bf16.mxu0 0
      %2240 = vmatpush1.bf16.msra.mxu0 0
      %2241 = vmatprep.subr.bf16.mxu0 0
      %2242 = vmatpush1.bf16.msra.mxu0 0
      %2243 = vmatprep.subr.bf16.mxu0 0
      %2244 = vmatpush1.bf16.msra.mxu0 0
      %2245 = vmatprep.subr.bf16.mxu0 0
      %2246 = vmatpush1.bf16.msra.mxu0 0
      %2247 = vmatprep.mubr.bf16.mxu0 0
      %2248 = vmatmul.mubr.bf16.gmra.mrb[0].mxu0 %v2143
      %v2249 = vpop.f32.mrb[0].mxu0
      %v2250 = vadd.f32 0.0, %v2249
      %v2251 = vpop.f32.mrb[0].mxu0
      %v2252 = vpop.f32.mrb[0].mxu0
      %v2253 = vadd.f32 0.0, %v2252
      %v2254 = vpop.f32.mrb[0].mxu0
      %2255 = vmatprep.mubr.bf16.mxu0 0
      %2256 = vmatmul.mubr.bf16.gmra.mrb[0].mxu0 %v2144
      %v2257 = vpop.f32.mrb[0].mxu0
      %v2258 = vadd.f32 0.0, %v2257
      %v2259 = vpop.f32.mrb[0].mxu0
      %v2260 = vpop.f32.mrb[0].mxu0
      %v2261 = vadd.f32 0.0, %v2260
      %v2262 = vpop.f32.mrb[0].mxu0
      %2263 = vmatprep.mubr.bf16.mxu0 0
      %2264 = vmatmul.mubr.bf16.gmra.mrb[0].mxu0 %v2145
      %v2265 = vpop.f32.mrb[0].mxu0
      %v2266 = vadd.f32 0.0, %v2265
      %v2267 = vpop.f32.mrb[0].mxu0
      %v2268 = vpop.f32.mrb[0].mxu0
      %v2269 = vadd.f32 0.0, %v2268
      %v2270 = vpop.f32.mrb[0].mxu0
      %2271 = vmatprep.mubr.bf16.mxu0 0
      %2272 = vmatmul.mubr.bf16.gmra.mrb[0].mxu0 %v2146
      %v2273 = vpop.f32.mrb[0].mxu0
      %v2274 = vadd.f32 0.0, %v2273
      %v2275 = vpop.f32.mrb[0].mxu0
      %v2276 = vpop.f32.mrb[0].mxu0
      %v2277 = vadd.f32 0.0, %v2276
      %v2278 = vpop.f32.mrb[0].mxu0
      %2279 = vmatprep.mubr.bf16.mxu0 0
      %2280 = vmatmul.mubr.bf16.gmra.mrb[0].mxu0 %v2147
      %v2281 = vpop.f32.mrb[0].mxu0
      %v2282 = vadd.f32 0.0, %v2281
      %v2283 = vpop.f32.mrb[0].mxu0
      %v2284 = vpop.f32.mrb[0].mxu0
      %v2285 = vadd.f32 0.0, %v2284
      %v2286 = vpop.f32.mrb[0].mxu0
      %2287 = vmatprep.mubr.bf16.mxu0 0
      %2288 = vmatmul.mubr.bf16.gmra.mrb[0].mxu0 %v2148
      %v2289 = vpop.f32.mrb[0].mxu0
      %v2290 = vadd.f32 0.0, %v2289
      %v2291 = vpop.f32.mrb[0].mxu0
      %v2292 = vpop.f32.mrb[0].mxu0
      %v2293 = vadd.f32 0.0, %v2292
      %v2294 = vpop.f32.mrb[0].mxu0
      %2295 = vmatprep.mubr.bf16.mxu0 0
      %2296 = vmatmul.mubr.bf16.gmra.mrb[0].mxu0 %v2149
      %v2297 = vpop.f32.mrb[0].mxu0
      %v2298 = vadd.f32 0.0, %v2297
      %v2299 = vpop.f32.mrb[0].mxu0
      %v2300 = vpop.f32.mrb[0].mxu0
      %v2301 = vadd.f32 0.0, %v2300
      %v2302 = vpop.f32.mrb[0].mxu0
      %2303 = vmatprep.mubr.bf16.mxu0 0
      %2304 = vmatmul.mubr.bf16.gmra.mrb[0].mxu0 %v2150
      %v2305 = vpop.f32.mrb[0].mxu0
      %v2306 = vadd.f32 0.0, %v2305
      %v2307 = vpop.f32.mrb[0].mxu0
      %v2308 = vpop.f32.mrb[0].mxu0
      %v2309 = vadd.f32 0.0, %v2308
      %v2310 = vpop.f32.mrb[0].mxu0
      %2311 = vdwg.mxu0
      %v2312 = vld [vmem:[%s8] sm:$0x1]
      %v2314 = vlaneseq
      %v2315 = vshrl.u32 %v2314, 7
      %v2316 = vsub.s32 0, %v2315
      %v2317 = vrot.slane %v2312, %v2316
      %v2319 = vmul.f32 %v2250, %v2317
      %v2320 = vmul.f32 %v2253, %v2317
      %v2321 = vmul.f32 %v2258, %v2317
      %v2322 = vmul.f32 %v2261, %v2317
      %v2323 = vmul.f32 %v2266, %v2317
      %v2324 = vmul.f32 %v2269, %v2317
      %v2325 = vmul.f32 %v2274, %v2317
      %v2326 = vmul.f32 %v2277, %v2317
      %v2327 = vmul.f32 %v2282, %v2317
      %v2328 = vmul.f32 %v2285, %v2317
      %v2329 = vmul.f32 %v2290, %v2317
      %v2330 = vmul.f32 %v2293, %v2317
      %v2331 = vmul.f32 %v2298, %v2317
      %v2332 = vmul.f32 %v2301, %v2317
      %v2333 = vmul.f32 %v2306, %v2317
      %v2334 = vmul.f32 %v2309, %v2317
      %v2335 = vld [vmem:[%s9] sm:$0x1]
      %v2337 = vlaneseq
      %v2338 = vshrl.u32 %v2337, 7
      %v2339 = vsub.s32 0, %v2338
      %v2340 = vrot.slane %v2335, %v2339
      %v2342 = vadd.f32 %v2319, %v2340
      %v2343 = vadd.f32 %v2320, %v2340
      %v2344 = vadd.f32 %v2321, %v2340
      %v2345 = vadd.f32 %v2322, %v2340
      %v2346 = vadd.f32 %v2323, %v2340
      %v2347 = vadd.f32 %v2324, %v2340
      %v2348 = vadd.f32 %v2325, %v2340
      %v2349 = vadd.f32 %v2326, %v2340
      %v2350 = vadd.f32 %v2327, %v2340
      %v2351 = vadd.f32 %v2328, %v2340
      %v2352 = vadd.f32 %v2329, %v2340
      %v2353 = vadd.f32 %v2330, %v2340
      %v2354 = vadd.f32 %v2331, %v2340
      %v2355 = vadd.f32 %v2332, %v2340
      %v2356 = vadd.f32 %v2333, %v2340
      %v2357 = vadd.f32 %v2334, %v2340
      %s2358 = scalar_lea.vmem %s387, 16
      %v2359 = vld [vmem:[%s2358] sm:$0xff]
      %v2360 = vld [vmem:[%s2358 + $0x8] sm:$0xff]
      %v2361 = vld [vmem:[%s2358 + $0x10] sm:$0xff]
      %v2362 = vld [vmem:[%s2358 + $0x18] sm:$0xff]
      %v2363 = vld [vmem:[%s2358 + $0x20] sm:$0xff]
      %v2364 = vld [vmem:[%s2358 + $0x28] sm:$0xff]
      %v2365 = vld [vmem:[%s2358 + $0x30] sm:$0xff]
      %v2366 = vld [vmem:[%s2358 + $0x38] sm:$0xff]
      %v2367 = vld [vmem:[%s2358 + $0x40] sm:$0xff]
      %v2368 = vld [vmem:[%s2358 + $0x48] sm:$0xff]
      %v2369 = vld [vmem:[%s2358 + $0x50] sm:$0xff]
      %v2370 = vld [vmem:[%s2358 + $0x58] sm:$0xff]
      %v2371 = vld [vmem:[%s2358 + $0x60] sm:$0xff]
      %v2372 = vld [vmem:[%s2358 + $0x68] sm:$0xff]
      %v2373 = vld [vmem:[%s2358 + $0x70] sm:$0xff]
      %v2374 = vld [vmem:[%s2358 + $0x78] sm:$0xff]
      %v2375 = vadd.f32 %v2342, %v2359
      %v2376 = vadd.f32 %v2343, %v2360
      %v2377 = vadd.f32 %v2344, %v2361
      %v2378 = vadd.f32 %v2345, %v2362
      %v2379 = vadd.f32 %v2346, %v2363
      %v2380 = vadd.f32 %v2347, %v2364
      %v2381 = vadd.f32 %v2348, %v2365
      %v2382 = vadd.f32 %v2349, %v2366
      %v2383 = vadd.f32 %v2350, %v2367
      %v2384 = vadd.f32 %v2351, %v2368
      %v2385 = vadd.f32 %v2352, %v2369
      %v2386 = vadd.f32 %v2353, %v2370
      %v2387 = vadd.f32 %v2354, %v2371
      %v2388 = vadd.f32 %v2355, %v2372
      %v2389 = vadd.f32 %v2356, %v2373
      %v2390 = vadd.f32 %v2357, %v2374
      %v2391 = vmax.f32 %v2375, 0.0
      %v2392 = vmax.f32 %v2376, 0.0
      %v2393 = vmax.f32 %v2377, 0.0
      %v2394 = vmax.f32 %v2378, 0.0
      %v2395 = vmax.f32 %v2379, 0.0
      %v2396 = vmax.f32 %v2380, 0.0
      %v2397 = vmax.f32 %v2381, 0.0
      %v2398 = vmax.f32 %v2382, 0.0
      %v2399 = vmax.f32 %v2383, 0.0
      %v2400 = vmax.f32 %v2384, 0.0
      %v2401 = vmax.f32 %v2385, 0.0
      %v2402 = vmax.f32 %v2386, 0.0
      %v2403 = vmax.f32 %v2387, 0.0
      %v2404 = vmax.f32 %v2388, 0.0
      %v2405 = vmax.f32 %v2389, 0.0
      %v2406 = vmax.f32 %v2390, 0.0
      %2407 = vst [vmem:[%s397] sm:$0xff] %v2391
      %2408 = vst [vmem:[%s397 + $0x8] sm:$0xff] %v2392
      %2409 = vst [vmem:[%s397 + $0x10] sm:$0xff] %v2393
      %2410 = vst [vmem:[%s397 + $0x18] sm:$0xff] %v2394
      %2411 = vst [vmem:[%s397 + $0x20] sm:$0xff] %v2395
      %2412 = vst [vmem:[%s397 + $0x28] sm:$0xff] %v2396
      %2413 = vst [vmem:[%s397 + $0x30] sm:$0xff] %v2397
      %2414 = vst [vmem:[%s397 + $0x38] sm:$0xff] %v2398
      %2415 = vst [vmem:[%s397 + $0x40] sm:$0xff] %v2399
      %2416 = vst [vmem:[%s397 + $0x48] sm:$0xff] %v2400
      %2417 = vst [vmem:[%s397 + $0x50] sm:$0xff] %v2401
      %2418 = vst [vmem:[%s397 + $0x58] sm:$0xff] %v2402
      %2419 = vst [vmem:[%s397 + $0x60] sm:$0xff] %v2403
      %2420 = vst [vmem:[%s397 + $0x68] sm:$0xff] %v2404
      %2421 = vst [vmem:[%s397 + $0x70] sm:$0xff] %v2405
      %2422 = vst [vmem:[%s397 + $0x78] sm:$0xff] %v2406
      %s2423 = smul.u32 8, %s26
      %p2424 = scmp.lt.s32.totalorder %s25, 1
      %s2425 = scalar_select %p2424, %s25, 1
      %p2426 = scmp.lt.s32.totalorder %s2423, 15
      %s2427 = scalar_select %p2426, %s2423, 15
      %s2428 = smul.addr %s2427, 2
      %s2429 = smul.addr %s2425, 32
      %s2430 = sadd.s32 %s2428, %s2429
      %s2431 = smul.addr %s2430, 8
      %s2432 = scalar_lea.vmem %s10, %s2431
      // Predicated region
      $region61: #{bottleneck_forward.1} parent=59 // pred_check
        %p2433 = pneg %p270
      $region62: #{bottleneck_forward.1} parent=59 // pred_check_branch
        %2435 = sbr.rel (%p2433) target = $region64
      $region63: #{bottleneck_forward.1} parent=59 // pred_region
        %s2436 = smul.u32 8, %s26
      $region64: #{bottleneck_forward.1} parent=59 // pred_fallthru
        _
    $region60: #{bottleneck_forward.1} parent=5 // pred_fallthru
      _
    %p2437 = scmp.le.s32.totalorder 2, %s16
    // Predicated region
    $region65: #{bottleneck_forward.1} parent=5 // pred_check
      %p2438 = pneg %p2437
    $region66: #{bottleneck_forward.1} parent=5 // pred_check_branch
      %2440 = sbr.rel (%p2438) target = $region68
    $region67: #{bottleneck_forward.1} parent=5 // pred_region
      %s2441 = ssub.s32 %s16, 2
      // Predicated region
      $region69: #{bottleneck_forward.1} parent=67 // pred_check
        %p2442 = pneg %p276
      $region70: #{bottleneck_forward.1} parent=67 // pred_check_branch
        %2444 = sbr.rel (%p2442) target = $region72
      $region71: #{bottleneck_forward.1} parent=67 // pred_region
        %s2445 = smul.u32 8, %s28
        %p2446 = scmp.lt.s32.totalorder %s27, 1
        %s2447 = scalar_select %p2446, %s27, 1
        %p2448 = scmp.lt.s32.totalorder %s2445, 15
        %s2449 = scalar_select %p2448, %s2445, 15
        %s2450 = smul.addr %s2449, 2
        %s2451 = smul.addr %s2447, 32
        %s2452 = sadd.s32 %s2450, %s2451
        %s2453 = smul.addr %s2452, 8
        %s2454 = scalar_lea.vmem %s10, %s2453
      $region72: #{bottleneck_forward.1} parent=67 // pred_fallthru
        _
    $region68: #{bottleneck_forward.1} parent=5 // pred_fallthru
      _
  $region6: #{bottleneck_forward.1} parent=0 // loop_footer
    %s20 = sadd.s32 1, %s16
  $region7: #{bottleneck_forward.1} parent=0 // loop_footer_branch
    %15 = sbr.rel target = $region3
  $region8: #{bottleneck_forward.1} parent=0 // loop_exit
    _

</llo_original>
